<compile_context>
chip_gen: v7x
topology: tpu7x:2x2x1
jax: 0.10.0
libtpu: 0.0.40
codegen_flags: <defaults>
</compile_context>

<pallas_src>
import functools

import jax
import jax.numpy as jnp
from jax.experimental import pallas as pl
from jax.experimental.pallas import tpu as pltpu


# ----------------------------- Pallas kernel --------------------------------

def _layer_norm(x, w, b, eps=1e-5):
    # x: (M, c) f32, w/b: (1, c) f32 — torch.nn.LayerNorm (biased variance).
    mu = jnp.mean(x, axis=-1, keepdims=True)
    var = jnp.mean((x - mu) ** 2, axis=-1, keepdims=True)
    return (x - mu) * jax.lax.rsqrt(var + eps) * w + b


def transformer_kernel(
    x_ref,
    ln1w_ref, ln1b_ref, wqkv_ref, wproj_ref, bproj_ref,
    ln2w_ref, ln2b_ref, w1_ref, b1_ref, w2_ref, b2_ref,
    o_ref,
    x_acc, ctx_acc,
    *, num_heads,
):
    """One grid step = one TransformerLayer applied to one batch block.

    Grid = (batch_blocks, num_layers), layer axis innermost / arbitrary.
    x_acc (VMEM scratch) carries the f32 residual stream across the layer
    axis; o_ref is written only at the last layer.
    """
    layer = pl.program_id(1)
    num_layers = pl.num_programs(1)

    bb, n, c = x_ref.shape
    hd = c // num_heads
    m = bb * n                                 # flattened rows for the MXU

    @pl.when(layer == 0)
    def _():
        x_acc[...] = x_ref[...]                # load residual stream once

    x = x_acc[...].reshape(m, c)               # f32 residual stream

    # ---------------- attention branch: proj(MHA(LN1(x))) -------------------
    xn = _layer_norm(x, ln1w_ref[...], ln1b_ref[...]).astype(jnp.bfloat16)

    # Single fused QKV matmul (scale already folded into the q columns).
    qkv = jnp.dot(xn, wqkv_ref[...], preferred_element_type=jnp.float32)  # (m, 3c)
    q3 = qkv[:, :c].reshape(bb, n, c).astype(jnp.bfloat16)
    k3 = qkv[:, c:2 * c].reshape(bb, n, c).astype(jnp.bfloat16)
    v3 = qkv[:, 2 * c:].reshape(bb, n, c).astype(jnp.bfloat16)

    # Transpose-free heads: static loop over heads, batch-batched contractions.
    for h in range(num_heads):
        cols = slice(h * hd, (h + 1) * hd)
        s = jnp.einsum("bqd,bkd->bqk", q3[:, :, cols], k3[:, :, cols],
                       preferred_element_type=jnp.float32)          # (bb, n, n)
        s = s - jnp.max(s, axis=-1, keepdims=True)
        p = jnp.exp(s)
        p = p * pl.reciprocal(jnp.sum(p, axis=-1, keepdims=True), approx=True)
        ctx_acc[:, :, cols] = jnp.einsum(
            "bqk,bkd->bqd", p.astype(jnp.bfloat16), v3[:, :, cols],
            preferred_element_type=jnp.float32)                     # (bb, n, hd)

    attn = jnp.dot(ctx_acc[...].reshape(m, c).astype(jnp.bfloat16), wproj_ref[...],
                   preferred_element_type=jnp.float32) + bproj_ref[...]
    x = x + attn

    # ---------------- MLP branch: MLP(LN2(x)) --------------------------------
    xn2 = _layer_norm(x, ln2w_ref[...], ln2b_ref[...]).astype(jnp.bfloat16)
    h1 = jnp.dot(xn2, w1_ref[...], preferred_element_type=jnp.float32) + b1_ref[...]
    h1 = jnp.maximum(h1, 0.0)                                        # relu
    h2 = jnp.dot(h1.astype(jnp.bfloat16), w2_ref[...],
                 preferred_element_type=jnp.float32) + b2_ref[...]
    x = x + h2

    x_acc[...] = x.reshape(bb, n, c)

    @pl.when(layer == num_layers - 1)
    def _():
        o_ref[...] = x_acc[...].astype(o_ref.dtype)


# ----------------------------- wrapper ---------------------------------------

_F32 = jnp.float32
_BF16 = jnp.bfloat16


def _stack(layer_params, key, dtype):
    return jnp.stack([p[key] for p in layer_params]).astype(dtype)


def transformer_forward(x, layer_params, *, num_heads, block_b=None):
    """Transformer.forward (enc_dec=False, y=None, mask=None).

    All layers fused into a single pallas_call; x: (b, n, c) float32.
    """
    b, n, c = x.shape
    num_layers = len(layer_params)
    assert c % num_heads == 0
    hd = c // num_heads
    scale = float(hd) ** (-0.5)
    hidden = layer_params[0]["w1"].shape[1]

    # Rows-per-grid-step: single-TC chips (v5e/v6e) want big blocks (serial
    # grid, ~0.35 us/step overhead), so target ~512 MXU rows.
    if block_b is None:
        block_b = max(1, min(b, max(1, 512 // max(n, 1))))
    block_b = max(1, min(int(block_b), b))
    while b % block_b:
        block_b -= 1
    grid_b = b // block_b

    # ---- stacked per-layer weights (leading layer axis, bf16 MXU operands) ----
    # Fused QKV weight with 1/sqrt(hd) folded into the q columns once here.
    wqkv = jnp.stack(
        [jnp.concatenate([p["wq"] * scale, p["wk"], p["wv"]], axis=1)
         for p in layer_params]).astype(_BF16)                       # (L, c, 3c)
    weights = [
        _stack(layer_params, "ln1w", _F32),    # (L, 1, c)
        _stack(layer_params, "ln1b", _F32),    # (L, 1, c)
        wqkv,                                  # (L, c, 3c)
        _stack(layer_params, "wproj", _BF16),  # (L, c, c)
        _stack(layer_params, "bproj", _F32),   # (L, 1, c)
        _stack(layer_params, "ln2w", _F32),    # (L, 1, c)
        _stack(layer_params, "ln2b", _F32),    # (L, 1, c)
        _stack(layer_params, "w1", _BF16),     # (L, c, hidden)
        _stack(layer_params, "b1", _F32),      # (L, 1, hidden)
        _stack(layer_params, "w2", _BF16),     # (L, hidden, c)
        _stack(layer_params, "b2", _F32),      # (L, 1, c)
    ]

    # ---- explicit VMEM budget (with headroom, capped below v7x's 64 MiB) ----
    m_rows = block_b * n
    w_bytes = sum((w.size // num_layers) * w.dtype.itemsize for w in weights)
    act_bytes = block_b * n * c * 4
    inter_bytes = 4 * (4 * m_rows * 3 * c          # qkv + q/k/v views
                       + 2 * block_b * n * n       # one head's scores/probs
                       + 2 * m_rows * hidden       # MLP hidden
                       + 6 * m_rows * c)           # LN / residual temporaries
    needed = (2 * w_bytes          # double-buffered weights (layer prefetch)
              + 4 * act_bytes      # x + out pipeline buffers
              + 2 * act_bytes      # x_acc + ctx_acc scratch
              + inter_bytes)
    vmem_limit = int(min(56 * 2 ** 20, max(32 * 2 ** 20, needed * 3 // 2)))

    x_spec = pl.BlockSpec((block_b, n, c), lambda i, l: (i, 0, 0))
    out_spec = pl.BlockSpec((block_b, n, c), lambda i, l: (i, 0, 0))
    w_specs = [pl.BlockSpec((None,) + w.shape[1:], lambda i, l: (l, 0, 0))
               for w in weights]

    kernel = functools.partial(transformer_kernel, num_heads=num_heads)
    return pl.pallas_call(
        kernel,
        out_shape=jax.ShapeDtypeStruct((b, n, c), jnp.float32),
        grid_spec=pltpu.PrefetchScalarGridSpec(
            num_scalar_prefetch=0,
            grid=(grid_b, num_layers),
            in_specs=[x_spec] + w_specs,
            out_specs=out_spec,
            scratch_shapes=[
                pltpu.VMEM((block_b, n, c), jnp.float32),   # residual stream
                pltpu.VMEM((block_b, n, c), jnp.float32),   # per-head ctx
            ],
        ),
        compiler_params=pltpu.CompilerParams(
            dimension_semantics=("parallel", "arbitrary"),
            vmem_limit_bytes=vmem_limit,
        ),
    )(x, *weights)


# ------------------------- parameter construction ---------------------------

def init_layer_params(key, dim_self, num_heads, mlp_ratio):
    hidden = int(dim_self * mlp_ratio)
    ks = jax.random.split(key, 7)
    s = 0.02
    return {
        # LayerNorm 1
        "ln1w": jnp.ones((1, dim_self), jnp.float32),
        "ln1b": jnp.zeros((1, dim_self), jnp.float32),
        # attention (bias=False for to_queries / to_keys_values; project has bias)
        # wk/wv correspond to the first / second half of torch's to_keys_values.
        "wq": s * jax.random.normal(ks[0], (dim_self, dim_self), jnp.float32),
        "wk": s * jax.random.normal(ks[1], (dim_self, dim_self), jnp.float32),
        "wv": s * jax.random.normal(ks[2], (dim_self, dim_self), jnp.float32),
        "wproj": s * jax.random.normal(ks[3], (dim_self, dim_self), jnp.float32),
        "bproj": s * jax.random.normal(ks[4], (1, dim_self), jnp.float32),
        # LayerNorm 2
        "ln2w": jnp.ones((1, dim_self), jnp.float32),
        "ln2b": jnp.zeros((1, dim_self), jnp.float32),
        # MLP (biases present, as in nn.Linear defaults)
        "w1": s * jax.random.normal(ks[5], (dim_self, hidden), jnp.float32),
        "b1": jnp.zeros((1, hidden), jnp.float32),
        "w2": s * jax.random.normal(ks[6], (hidden, dim_self), jnp.float32),
        "b2": jnp.zeros((1, dim_self), jnp.float32),
    }


# --------------------------- pure-JAX reference ------------------------------

def _ref_layer(x, p, num_heads):
    def ln(t, w, b):
        mu = t.mean(-1, keepdims=True)
        var = ((t - mu) ** 2).mean(-1, keepdims=True)
        return (t - mu) / jnp.sqrt(var + 1e-5) * w[0] + b[0]

    b_, n, c = x.shape
    hd = c // num_heads
    scale = hd ** (-0.5)

    xn = ln(x, p["ln1w"], p["ln1b"])
    q = (xn @ p["wq"]).reshape(b_, n, num_heads, hd)
    k = (xn @ p["wk"]).reshape(b_, n, num_heads, hd)
    v = (xn @ p["wv"]).reshape(b_, n, num_heads, hd)
    att = jnp.einsum("bnhd,bmhd->bnmh", q, k) * scale
    att = jax.nn.softmax(att, axis=2)
    out = jnp.einsum("bnmh,bmhd->bnhd", att, v).reshape(b_, n, c)
    out = out @ p["wproj"] + p["bproj"][0]
    x = x + out

    xn2 = ln(x, p["ln2w"], p["ln2b"])
    h1 = jax.nn.relu(xn2 @ p["w1"] + p["b1"][0])
    x = x + (h1 @ p["w2"] + p["b2"][0])
    return x


def _ref_forward(x, layer_params, num_heads):
    for p in layer_params:
        x = _ref_layer(x, p, num_heads)
    return x


# ----------------------------------- main ------------------------------------

if __name__ == "__main__":
    # small shapes consistent with the module
    batch, seq = 2, 8
    dim_self, num_heads, num_layers, mlp_ratio = 32, 4, 2, 2.0

    key = jax.random.PRNGKey(0)
    kx, *kl = jax.random.split(key, 1 + num_layers)
    x = jax.random.normal(kx, (batch, seq, dim_self), jnp.float32)
    layer_params = [
        init_layer_params(kl[i], dim_self, num_heads, mlp_ratio)
        for i in range(num_layers)
    ]

    out = transformer_forward(x, layer_params, num_heads=num_heads)
    out = jax.block_until_ready(out)

    ref = _ref_forward(x, layer_params, num_heads)
    assert out.shape == (batch, seq, dim_self)
    # bf16 MXU operands (f32 accumulation) + approx reciprocal vs f32 reference.
    assert jnp.allclose(out, ref, atol=3e-2, rtol=3e-2), "mismatch vs JAX reference"

    print("KERNEL_OK")
</pallas_src>

<mosaic_0001>
module attributes {stable_mosaic.version = 11 : i64} {
  func.func @transformer_kernel(%arg0: i32, %arg1: i32, %arg2: memref<2x8x32xf32, #tpu.memory_space<vmem>>, %arg3: memref<1x1x32xf32, #tpu.memory_space<vmem>>, %arg4: memref<1x1x32xf32, #tpu.memory_space<vmem>>, %arg5: memref<1x32x96xbf16, #tpu.memory_space<vmem>>, %arg6: memref<1x32x32xbf16, #tpu.memory_space<vmem>>, %arg7: memref<1x1x32xf32, #tpu.memory_space<vmem>>, %arg8: memref<1x1x32xf32, #tpu.memory_space<vmem>>, %arg9: memref<1x1x32xf32, #tpu.memory_space<vmem>>, %arg10: memref<1x32x64xbf16, #tpu.memory_space<vmem>>, %arg11: memref<1x1x64xf32, #tpu.memory_space<vmem>>, %arg12: memref<1x64x32xbf16, #tpu.memory_space<vmem>>, %arg13: memref<1x1x32xf32, #tpu.memory_space<vmem>>, %arg14: memref<2x8x32xf32, #tpu.memory_space<vmem>>, %arg15: memref<2x8x32xf32, #tpu.memory_space<vmem>>, %arg16: memref<2x8x32xf32, #tpu.memory_space<vmem>>) attributes {dimension_semantics = [#tpu.dimension_semantics<parallel>, #tpu.dimension_semantics<arbitrary>], iteration_bounds = array<i64: 1, 2>, scalar_prefetch = 0 : i64, scratch_operands = 2 : i64, tpu.core_type = #tpu.core_type<tc>, window_params = [{transform_indices = @transform_0, window_bounds = array<i64: 2, 8, 32>}, {transform_indices = @transform_1, window_bounds = array<i64: 1, 1, 32>}, {transform_indices = @transform_2, window_bounds = array<i64: 1, 1, 32>}, {transform_indices = @transform_3, window_bounds = array<i64: 1, 32, 96>}, {transform_indices = @transform_4, window_bounds = array<i64: 1, 32, 32>}, {transform_indices = @transform_5, window_bounds = array<i64: 1, 1, 32>}, {transform_indices = @transform_6, window_bounds = array<i64: 1, 1, 32>}, {transform_indices = @transform_7, window_bounds = array<i64: 1, 1, 32>}, {transform_indices = @transform_8, window_bounds = array<i64: 1, 32, 64>}, {transform_indices = @transform_9, window_bounds = array<i64: 1, 1, 64>}, {transform_indices = @transform_10, window_bounds = array<i64: 1, 64, 32>}, {transform_indices = @transform_11, window_bounds = array<i64: 1, 1, 32>}, {transform_indices = @transform_12, window_bounds = array<i64: 2, 8, 32>}]} {
    %c0_i32 = arith.constant 0 : i32
    %0 = arith.cmpi eq, %arg1, %c0_i32 : i32
    %1 = arith.extui %0 : i1 to i32
    %c0_i32_0 = arith.constant 0 : i32
    %2 = arith.cmpi ne, %1, %c0_i32_0 : i32
    scf.if %2 {
      %c0_82 = arith.constant 0 : index
      %c0_83 = arith.constant 0 : index
      %c0_84 = arith.constant 0 : index
      %173 = vector.load %arg2[%c0_82, %c0_83, %c0_84] : memref<2x8x32xf32, #tpu.memory_space<vmem>>, vector<2x8x32xf32>
      %c0_85 = arith.constant 0 : index
      %c0_86 = arith.constant 0 : index
      %c0_87 = arith.constant 0 : index
      %174 = vector.load %arg15[%c0_85, %c0_86, %c0_87] : memref<2x8x32xf32, #tpu.memory_space<vmem>>, vector<2x8x32xf32>
      tpu.vector_store %arg15[%c0_85, %c0_86, %c0_87], %173 {strides = array<i32>} : memref<2x8x32xf32, #tpu.memory_space<vmem>>, vector<2x8x32xf32>,
    } else {
    }
    %c0 = arith.constant 0 : index
    %c0_1 = arith.constant 0 : index
    %c0_2 = arith.constant 0 : index
    %3 = vector.load %arg15[%c0, %c0_1, %c0_2] : memref<2x8x32xf32, #tpu.memory_space<vmem>>, vector<2x8x32xf32>
    %4 = vector.shape_cast %3 : vector<2x8x32xf32> to vector<16x32xf32>
    %c0_3 = arith.constant 0 : index
    %c0_4 = arith.constant 0 : index
    %c0_5 = arith.constant 0 : index
    %5 = vector.load %arg3[%c0_3, %c0_4, %c0_5] : memref<1x1x32xf32, #tpu.memory_space<vmem>>, vector<1x1x32xf32>
    %6 = vector.shape_cast %5 : vector<1x1x32xf32> to vector<1x32xf32>
    %c0_6 = arith.constant 0 : index
    %c0_7 = arith.constant 0 : index
    %c0_8 = arith.constant 0 : index
    %7 = vector.load %arg4[%c0_6, %c0_7, %c0_8] : memref<1x1x32xf32, #tpu.memory_space<vmem>>, vector<1x1x32xf32>
    %8 = vector.shape_cast %7 : vector<1x1x32xf32> to vector<1x32xf32>
    %cst = arith.constant dense<0.000000e+00> : vector<16xf32>
    %9 = vector.multi_reduction <add>, %4, %cst [1] : vector<16x32xf32> to vector<16xf32>
    %10 = vector.shape_cast %9 : vector<16xf32> to vector<16x1xf32>
    %cst_9 = arith.constant 3.200000e+01 : f32
    %11 = vector.broadcast %cst_9 : f32 to vector<16x1xf32>
    %12 = arith.divf %10, %11 : vector<16x1xf32>
    %13 = vector.broadcast %12 : vector<16x1xf32> to vector<16x32xf32>
    %14 = arith.subf %4, %13 : vector<16x32xf32>
    %15 = arith.mulf %14, %14 : vector<16x32xf32>
    %cst_10 = arith.constant dense<0.000000e+00> : vector<16xf32>
    %16 = vector.multi_reduction <add>, %15, %cst_10 [1] : vector<16x32xf32> to vector<16xf32>
    %17 = vector.shape_cast %16 : vector<16xf32> to vector<16x1xf32>
    %cst_11 = arith.constant 3.200000e+01 : f32
    %18 = vector.broadcast %cst_11 : f32 to vector<16x1xf32>
    %19 = arith.divf %17, %18 : vector<16x1xf32>
    %20 = vector.broadcast %12 : vector<16x1xf32> to vector<16x32xf32>
    %21 = arith.subf %4, %20 : vector<16x32xf32>
    %cst_12 = arith.constant 9.99999974E-6 : f32
    %22 = vector.broadcast %cst_12 : f32 to vector<16x1xf32>
    %23 = arith.addf %19, %22 : vector<16x1xf32>
    %24 = math.rsqrt %23 : vector<16x1xf32>
    %25 = vector.broadcast %24 : vector<16x1xf32> to vector<16x32xf32>
    %26 = arith.mulf %21, %25 : vector<16x32xf32>
    %27 = vector.broadcast %6 : vector<1x32xf32> to vector<16x32xf32>
    %28 = arith.mulf %26, %27 : vector<16x32xf32>
    %29 = vector.broadcast %8 : vector<1x32xf32> to vector<16x32xf32>
    %30 = arith.addf %28, %29 : vector<16x32xf32>
    %31 = arith.truncf %30 : vector<16x32xf32> to vector<16x32xbf16>
    %c0_13 = arith.constant 0 : index
    %c0_14 = arith.constant 0 : index
    %c0_15 = arith.constant 0 : index
    %32 = vector.load %arg5[%c0_13, %c0_14, %c0_15] : memref<1x32x96xbf16, #tpu.memory_space<vmem>>, vector<1x32x96xbf16>
    %33 = vector.shape_cast %32 : vector<1x32x96xbf16> to vector<32x96xbf16>
    %cst_16 = arith.constant dense<0.000000e+00> : vector<16x96xf32>
    %34 = tpu.matmul %31, %33, %cst_16 {dimension_numbers = #tpu.dot_dimension_numbers<[1], [0], [0], [1], [0, 0, 1, 1], [], []>} : vector<16x32xbf16>, vector<32x96xbf16>, vector<16x96xf32> -> vector<16x96xf32>
    %35 = vector.extract_strided_slice %34 {offsets = [0, 0], sizes = [16, 32], strides = [1, 1]} : vector<16x96xf32> to vector<16x32xf32>
    %36 = vector.shape_cast %35 : vector<16x32xf32> to vector<2x8x32xf32>
    %37 = arith.truncf %36 : vector<2x8x32xf32> to vector<2x8x32xbf16>
    %38 = vector.extract_strided_slice %34 {offsets = [0, 32], sizes = [16, 32], strides = [1, 1]} : vector<16x96xf32> to vector<16x32xf32>
    %39 = vector.shape_cast %38 : vector<16x32xf32> to vector<2x8x32xf32>
    %40 = arith.truncf %39 : vector<2x8x32xf32> to vector<2x8x32xbf16>
    %41 = vector.extract_strided_slice %34 {offsets = [0, 64], sizes = [16, 32], strides = [1, 1]} : vector<16x96xf32> to vector<16x32xf32>
    %42 = vector.shape_cast %41 : vector<16x32xf32> to vector<2x8x32xf32>
    %43 = arith.truncf %42 : vector<2x8x32xf32> to vector<2x8x32xbf16>
    %44 = vector.extract_strided_slice %37 {offsets = [0, 0, 0], sizes = [2, 8, 8], strides = [1, 1, 1]} : vector<2x8x32xbf16> to vector<2x8x8xbf16>
    %45 = vector.extract_strided_slice %40 {offsets = [0, 0, 0], sizes = [2, 8, 8], strides = [1, 1, 1]} : vector<2x8x32xbf16> to vector<2x8x8xbf16>
    "tpu.trace_start"() <{level = 10 : i32, message = "bqd,bkd->bqk"}> : () -> ()
    %cst_17 = arith.constant dense<0.000000e+00> : vector<2x8x8xf32>
    %46 = tpu.matmul %44, %45, %cst_17 {dimension_numbers = #tpu.dot_dimension_numbers<[2], [2], [1], [1], [0, 0, 0, 1, 1, 1], [0], [0]>} : vector<2x8x8xbf16>, vector<2x8x8xbf16>, vector<2x8x8xf32> -> vector<2x8x8xf32>
    "tpu.trace_stop"() : () -> ()
    %cst_18 = arith.constant dense<0xFF800000> : vector<2x8xf32>
    %47 = vector.multi_reduction <maximumf>, %46, %cst_18 [2] : vector<2x8x8xf32> to vector<2x8xf32>
    %48 = vector.shape_cast %47 : vector<2x8xf32> to vector<2x8x1xf32>
    %49 = vector.broadcast %48 : vector<2x8x1xf32> to vector<2x8x8xf32>
    %50 = arith.subf %46, %49 : vector<2x8x8xf32>
    %51 = math.exp %50 : vector<2x8x8xf32>
    %cst_19 = arith.constant dense<0.000000e+00> : vector<2x8xf32>
    %52 = vector.multi_reduction <add>, %51, %cst_19 [2] : vector<2x8x8xf32> to vector<2x8xf32>
    %53 = vector.shape_cast %52 : vector<2x8xf32> to vector<2x8x1xf32>
    %54 = tpu.reciprocal %53 {approx = true} : vector<2x8x1xf32> -> vector<2x8x1xf32>
    %55 = vector.broadcast %54 : vector<2x8x1xf32> to vector<2x8x8xf32>
    %56 = arith.mulf %51, %55 : vector<2x8x8xf32>
    %57 = arith.truncf %56 : vector<2x8x8xf32> to vector<2x8x8xbf16>
    %58 = vector.extract_strided_slice %43 {offsets = [0, 0, 0], sizes = [2, 8, 8], strides = [1, 1, 1]} : vector<2x8x32xbf16> to vector<2x8x8xbf16>
    "tpu.trace_start"() <{level = 10 : i32, message = "bqk,bkd->bqd"}> : () -> ()
    %cst_20 = arith.constant dense<0.000000e+00> : vector<2x8x8xf32>
    %59 = tpu.matmul %57, %58, %cst_20 {dimension_numbers = #tpu.dot_dimension_numbers<[2], [1], [1], [2], [0, 0, 0, 1, 1, 2], [0], [0]>} : vector<2x8x8xbf16>, vector<2x8x8xbf16>, vector<2x8x8xf32> -> vector<2x8x8xf32>
    "tpu.trace_stop"() : () -> ()
    %c0_21 = arith.constant 0 : index
    %c0_22 = arith.constant 0 : index
    %c0_23 = arith.constant 0 : index
    %60 = vector.load %arg16[%c0_21, %c0_22, %c0_23] : memref<2x8x32xf32, #tpu.memory_space<vmem>>, vector<2x8x8xf32>
    tpu.vector_store %arg16[%c0_21, %c0_22, %c0_23], %59 {strides = array<i32>} : memref<2x8x32xf32, #tpu.memory_space<vmem>>, vector<2x8x8xf32>,
    %61 = vector.extract_strided_slice %37 {offsets = [0, 0, 8], sizes = [2, 8, 8], strides = [1, 1, 1]} : vector<2x8x32xbf16> to vector<2x8x8xbf16>
    %62 = vector.extract_strided_slice %40 {offsets = [0, 0, 8], sizes = [2, 8, 8], strides = [1, 1, 1]} : vector<2x8x32xbf16> to vector<2x8x8xbf16>
    "tpu.trace_start"() <{level = 10 : i32, message = "bqd,bkd->bqk"}> : () -> ()
    %cst_24 = arith.constant dense<0.000000e+00> : vector<2x8x8xf32>
    %63 = tpu.matmul %61, %62, %cst_24 {dimension_numbers = #tpu.dot_dimension_numbers<[2], [2], [1], [1], [0, 0, 0, 1, 1, 1], [0], [0]>} : vector<2x8x8xbf16>, vector<2x8x8xbf16>, vector<2x8x8xf32> -> vector<2x8x8xf32>
    "tpu.trace_stop"() : () -> ()
    %cst_25 = arith.constant dense<0xFF800000> : vector<2x8xf32>
    %64 = vector.multi_reduction <maximumf>, %63, %cst_25 [2] : vector<2x8x8xf32> to vector<2x8xf32>
    %65 = vector.shape_cast %64 : vector<2x8xf32> to vector<2x8x1xf32>
    %66 = vector.broadcast %65 : vector<2x8x1xf32> to vector<2x8x8xf32>
    %67 = arith.subf %63, %66 : vector<2x8x8xf32>
    %68 = math.exp %67 : vector<2x8x8xf32>
    %cst_26 = arith.constant dense<0.000000e+00> : vector<2x8xf32>
    %69 = vector.multi_reduction <add>, %68, %cst_26 [2] : vector<2x8x8xf32> to vector<2x8xf32>
    %70 = vector.shape_cast %69 : vector<2x8xf32> to vector<2x8x1xf32>
    %71 = tpu.reciprocal %70 {approx = true} : vector<2x8x1xf32> -> vector<2x8x1xf32>
    %72 = vector.broadcast %71 : vector<2x8x1xf32> to vector<2x8x8xf32>
    %73 = arith.mulf %68, %72 : vector<2x8x8xf32>
    %74 = arith.truncf %73 : vector<2x8x8xf32> to vector<2x8x8xbf16>
    %75 = vector.extract_strided_slice %43 {offsets = [0, 0, 8], sizes = [2, 8, 8], strides = [1, 1, 1]} : vector<2x8x32xbf16> to vector<2x8x8xbf16>
    "tpu.trace_start"() <{level = 10 : i32, message = "bqk,bkd->bqd"}> : () -> ()
    %cst_27 = arith.constant dense<0.000000e+00> : vector<2x8x8xf32>
    %76 = tpu.matmul %74, %75, %cst_27 {dimension_numbers = #tpu.dot_dimension_numbers<[2], [1], [1], [2], [0, 0, 0, 1, 1, 2], [0], [0]>} : vector<2x8x8xbf16>, vector<2x8x8xbf16>, vector<2x8x8xf32> -> vector<2x8x8xf32>
    "tpu.trace_stop"() : () -> ()
    %c0_28 = arith.constant 0 : index
    %c0_29 = arith.constant 0 : index
    %c8 = arith.constant 8 : index
    %77 = vector.load %arg16[%c0_28, %c0_29, %c8] : memref<2x8x32xf32, #tpu.memory_space<vmem>>, vector<2x8x8xf32>
    tpu.vector_store %arg16[%c0_28, %c0_29, %c8], %76 {strides = array<i32>} : memref<2x8x32xf32, #tpu.memory_space<vmem>>, vector<2x8x8xf32>,
    %78 = vector.extract_strided_slice %37 {offsets = [0, 0, 16], sizes = [2, 8, 8], strides = [1, 1, 1]} : vector<2x8x32xbf16> to vector<2x8x8xbf16>
    %79 = vector.extract_strided_slice %40 {offsets = [0, 0, 16], sizes = [2, 8, 8], strides = [1, 1, 1]} : vector<2x8x32xbf16> to vector<2x8x8xbf16>
    "tpu.trace_start"() <{level = 10 : i32, message = "bqd,bkd->bqk"}> : () -> ()
    %cst_30 = arith.constant dense<0.000000e+00> : vector<2x8x8xf32>
    %80 = tpu.matmul %78, %79, %cst_30 {dimension_numbers = #tpu.dot_dimension_numbers<[2], [2], [1], [1], [0, 0, 0, 1, 1, 1], [0], [0]>} : vector<2x8x8xbf16>, vector<2x8x8xbf16>, vector<2x8x8xf32> -> vector<2x8x8xf32>
    "tpu.trace_stop"() : () -> ()
    %cst_31 = arith.constant dense<0xFF800000> : vector<2x8xf32>
    %81 = vector.multi_reduction <maximumf>, %80, %cst_31 [2] : vector<2x8x8xf32> to vector<2x8xf32>
    %82 = vector.shape_cast %81 : vector<2x8xf32> to vector<2x8x1xf32>
    %83 = vector.broadcast %82 : vector<2x8x1xf32> to vector<2x8x8xf32>
    %84 = arith.subf %80, %83 : vector<2x8x8xf32>
    %85 = math.exp %84 : vector<2x8x8xf32>
    %cst_32 = arith.constant dense<0.000000e+00> : vector<2x8xf32>
    %86 = vector.multi_reduction <add>, %85, %cst_32 [2] : vector<2x8x8xf32> to vector<2x8xf32>
    %87 = vector.shape_cast %86 : vector<2x8xf32> to vector<2x8x1xf32>
    %88 = tpu.reciprocal %87 {approx = true} : vector<2x8x1xf32> -> vector<2x8x1xf32>
    %89 = vector.broadcast %88 : vector<2x8x1xf32> to vector<2x8x8xf32>
    %90 = arith.mulf %85, %89 : vector<2x8x8xf32>
    %91 = arith.truncf %90 : vector<2x8x8xf32> to vector<2x8x8xbf16>
    %92 = vector.extract_strided_slice %43 {offsets = [0, 0, 16], sizes = [2, 8, 8], strides = [1, 1, 1]} : vector<2x8x32xbf16> to vector<2x8x8xbf16>
    "tpu.trace_start"() <{level = 10 : i32, message = "bqk,bkd->bqd"}> : () -> ()
    %cst_33 = arith.constant dense<0.000000e+00> : vector<2x8x8xf32>
    %93 = tpu.matmul %91, %92, %cst_33 {dimension_numbers = #tpu.dot_dimension_numbers<[2], [1], [1], [2], [0, 0, 0, 1, 1, 2], [0], [0]>} : vector<2x8x8xbf16>, vector<2x8x8xbf16>, vector<2x8x8xf32> -> vector<2x8x8xf32>
    "tpu.trace_stop"() : () -> ()
    %c0_34 = arith.constant 0 : index
    %c0_35 = arith.constant 0 : index
    %c16 = arith.constant 16 : index
    %94 = vector.load %arg16[%c0_34, %c0_35, %c16] : memref<2x8x32xf32, #tpu.memory_space<vmem>>, vector<2x8x8xf32>
    tpu.vector_store %arg16[%c0_34, %c0_35, %c16], %93 {strides = array<i32>} : memref<2x8x32xf32, #tpu.memory_space<vmem>>, vector<2x8x8xf32>,
    %95 = vector.extract_strided_slice %37 {offsets = [0, 0, 24], sizes = [2, 8, 8], strides = [1, 1, 1]} : vector<2x8x32xbf16> to vector<2x8x8xbf16>
    %96 = vector.extract_strided_slice %40 {offsets = [0, 0, 24], sizes = [2, 8, 8], strides = [1, 1, 1]} : vector<2x8x32xbf16> to vector<2x8x8xbf16>
    "tpu.trace_start"() <{level = 10 : i32, message = "bqd,bkd->bqk"}> : () -> ()
    %cst_36 = arith.constant dense<0.000000e+00> : vector<2x8x8xf32>
    %97 = tpu.matmul %95, %96, %cst_36 {dimension_numbers = #tpu.dot_dimension_numbers<[2], [2], [1], [1], [0, 0, 0, 1, 1, 1], [0], [0]>} : vector<2x8x8xbf16>, vector<2x8x8xbf16>, vector<2x8x8xf32> -> vector<2x8x8xf32>
    "tpu.trace_stop"() : () -> ()
    %cst_37 = arith.constant dense<0xFF800000> : vector<2x8xf32>
    %98 = vector.multi_reduction <maximumf>, %97, %cst_37 [2] : vector<2x8x8xf32> to vector<2x8xf32>
    %99 = vector.shape_cast %98 : vector<2x8xf32> to vector<2x8x1xf32>
    %100 = vector.broadcast %99 : vector<2x8x1xf32> to vector<2x8x8xf32>
    %101 = arith.subf %97, %100 : vector<2x8x8xf32>
    %102 = math.exp %101 : vector<2x8x8xf32>
    %cst_38 = arith.constant dense<0.000000e+00> : vector<2x8xf32>
    %103 = vector.multi_reduction <add>, %102, %cst_38 [2] : vector<2x8x8xf32> to vector<2x8xf32>
    %104 = vector.shape_cast %103 : vector<2x8xf32> to vector<2x8x1xf32>
    %105 = tpu.reciprocal %104 {approx = true} : vector<2x8x1xf32> -> vector<2x8x1xf32>
    %106 = vector.broadcast %105 : vector<2x8x1xf32> to vector<2x8x8xf32>
    %107 = arith.mulf %102, %106 : vector<2x8x8xf32>
    %108 = arith.truncf %107 : vector<2x8x8xf32> to vector<2x8x8xbf16>
    %109 = vector.extract_strided_slice %43 {offsets = [0, 0, 24], sizes = [2, 8, 8], strides = [1, 1, 1]} : vector<2x8x32xbf16> to vector<2x8x8xbf16>
    "tpu.trace_start"() <{level = 10 : i32, message = "bqk,bkd->bqd"}> : () -> ()
    %cst_39 = arith.constant dense<0.000000e+00> : vector<2x8x8xf32>
    %110 = tpu.matmul %108, %109, %cst_39 {dimension_numbers = #tpu.dot_dimension_numbers<[2], [1], [1], [2], [0, 0, 0, 1, 1, 2], [0], [0]>} : vector<2x8x8xbf16>, vector<2x8x8xbf16>, vector<2x8x8xf32> -> vector<2x8x8xf32>
    "tpu.trace_stop"() : () -> ()
    %c0_40 = arith.constant 0 : index
    %c0_41 = arith.constant 0 : index
    %c24 = arith.constant 24 : index
    %111 = vector.load %arg16[%c0_40, %c0_41, %c24] : memref<2x8x32xf32, #tpu.memory_space<vmem>>, vector<2x8x8xf32>
    tpu.vector_store %arg16[%c0_40, %c0_41, %c24], %110 {strides = array<i32>} : memref<2x8x32xf32, #tpu.memory_space<vmem>>, vector<2x8x8xf32>,
    %c0_42 = arith.constant 0 : index
    %c0_43 = arith.constant 0 : index
    %c0_44 = arith.constant 0 : index
    %112 = vector.load %arg16[%c0_42, %c0_43, %c0_44] : memref<2x8x32xf32, #tpu.memory_space<vmem>>, vector<2x8x32xf32>
    %113 = vector.shape_cast %112 : vector<2x8x32xf32> to vector<16x32xf32>
    %114 = arith.truncf %113 : vector<16x32xf32> to vector<16x32xbf16>
    %c0_45 = arith.constant 0 : index
    %c0_46 = arith.constant 0 : index
    %c0_47 = arith.constant 0 : index
    %115 = vector.load %arg6[%c0_45, %c0_46, %c0_47] : memref<1x32x32xbf16, #tpu.memory_space<vmem>>, vector<1x32x32xbf16>
    %116 = vector.shape_cast %115 : vector<1x32x32xbf16> to vector<32x32xbf16>
    %cst_48 = arith.constant dense<0.000000e+00> : vector<16x32xf32>
    %117 = tpu.matmul %114, %116, %cst_48 {dimension_numbers = #tpu.dot_dimension_numbers<[1], [0], [0], [1], [0, 0, 1, 1], [], []>} : vector<16x32xbf16>, vector<32x32xbf16>, vector<16x32xf32> -> vector<16x32xf32>
    %c0_49 = arith.constant 0 : index
    %c0_50 = arith.constant 0 : index
    %c0_51 = arith.constant 0 : index
    %118 = vector.load %arg7[%c0_49, %c0_50, %c0_51] : memref<1x1x32xf32, #tpu.memory_space<vmem>>, vector<1x1x32xf32>
    %119 = vector.shape_cast %118 : vector<1x1x32xf32> to vector<1x32xf32>
    %120 = vector.broadcast %119 : vector<1x32xf32> to vector<16x32xf32>
    %121 = arith.addf %117, %120 : vector<16x32xf32>
    %122 = arith.addf %4, %121 : vector<16x32xf32>
    %c0_52 = arith.constant 0 : index
    %c0_53 = arith.constant 0 : index
    %c0_54 = arith.constant 0 : index
    %123 = vector.load %arg8[%c0_52, %c0_53, %c0_54] : memref<1x1x32xf32, #tpu.memory_space<vmem>>, vector<1x1x32xf32>
    %124 = vector.shape_cast %123 : vector<1x1x32xf32> to vector<1x32xf32>
    %c0_55 = arith.constant 0 : index
    %c0_56 = arith.constant 0 : index
    %c0_57 = arith.constant 0 : index
    %125 = vector.load %arg9[%c0_55, %c0_56, %c0_57] : memref<1x1x32xf32, #tpu.memory_space<vmem>>, vector<1x1x32xf32>
    %126 = vector.shape_cast %125 : vector<1x1x32xf32> to vector<1x32xf32>
    %cst_58 = arith.constant dense<0.000000e+00> : vector<16xf32>
    %127 = vector.multi_reduction <add>, %122, %cst_58 [1] : vector<16x32xf32> to vector<16xf32>
    %128 = vector.shape_cast %127 : vector<16xf32> to vector<16x1xf32>
    %cst_59 = arith.constant 3.200000e+01 : f32
    %129 = vector.broadcast %cst_59 : f32 to vector<16x1xf32>
    %130 = arith.divf %128, %129 : vector<16x1xf32>
    %131 = vector.broadcast %130 : vector<16x1xf32> to vector<16x32xf32>
    %132 = arith.subf %122, %131 : vector<16x32xf32>
    %133 = arith.mulf %132, %132 : vector<16x32xf32>
    %cst_60 = arith.constant dense<0.000000e+00> : vector<16xf32>
    %134 = vector.multi_reduction <add>, %133, %cst_60 [1] : vector<16x32xf32> to vector<16xf32>
    %135 = vector.shape_cast %134 : vector<16xf32> to vector<16x1xf32>
    %cst_61 = arith.constant 3.200000e+01 : f32
    %136 = vector.broadcast %cst_61 : f32 to vector<16x1xf32>
    %137 = arith.divf %135, %136 : vector<16x1xf32>
    %138 = vector.broadcast %130 : vector<16x1xf32> to vector<16x32xf32>
    %139 = arith.subf %122, %138 : vector<16x32xf32>
    %cst_62 = arith.constant 9.99999974E-6 : f32
    %140 = vector.broadcast %cst_62 : f32 to vector<16x1xf32>
    %141 = arith.addf %137, %140 : vector<16x1xf32>
    %142 = math.rsqrt %141 : vector<16x1xf32>
    %143 = vector.broadcast %142 : vector<16x1xf32> to vector<16x32xf32>
    %144 = arith.mulf %139, %143 : vector<16x32xf32>
    %145 = vector.broadcast %124 : vector<1x32xf32> to vector<16x32xf32>
    %146 = arith.mulf %144, %145 : vector<16x32xf32>
    %147 = vector.broadcast %126 : vector<1x32xf32> to vector<16x32xf32>
    %148 = arith.addf %146, %147 : vector<16x32xf32>
    %149 = arith.truncf %148 : vector<16x32xf32> to vector<16x32xbf16>
    %c0_63 = arith.constant 0 : index
    %c0_64 = arith.constant 0 : index
    %c0_65 = arith.constant 0 : index
    %150 = vector.load %arg10[%c0_63, %c0_64, %c0_65] : memref<1x32x64xbf16, #tpu.memory_space<vmem>>, vector<1x32x64xbf16>
    %151 = vector.shape_cast %150 : vector<1x32x64xbf16> to vector<32x64xbf16>
    %cst_66 = arith.constant dense<0.000000e+00> : vector<16x64xf32>
    %152 = tpu.matmul %149, %151, %cst_66 {dimension_numbers = #tpu.dot_dimension_numbers<[1], [0], [0], [1], [0, 0, 1, 1], [], []>} : vector<16x32xbf16>, vector<32x64xbf16>, vector<16x64xf32> -> vector<16x64xf32>
    %c0_67 = arith.constant 0 : index
    %c0_68 = arith.constant 0 : index
    %c0_69 = arith.constant 0 : index
    %153 = vector.load %arg11[%c0_67, %c0_68, %c0_69] : memref<1x1x64xf32, #tpu.memory_space<vmem>>, vector<1x1x64xf32>
    %154 = vector.shape_cast %153 : vector<1x1x64xf32> to vector<1x64xf32>
    %155 = vector.broadcast %154 : vector<1x64xf32> to vector<16x64xf32>
    %156 = arith.addf %152, %155 : vector<16x64xf32>
    %cst_70 = arith.constant 0.000000e+00 : f32
    %157 = vector.broadcast %cst_70 : f32 to vector<16x64xf32>
    %158 = arith.maximumf %156, %157 : vector<16x64xf32>
    %159 = arith.truncf %158 : vector<16x64xf32> to vector<16x64xbf16>
    %c0_71 = arith.constant 0 : index
    %c0_72 = arith.constant 0 : index
    %c0_73 = arith.constant 0 : index
    %160 = vector.load %arg12[%c0_71, %c0_72, %c0_73] : memref<1x64x32xbf16, #tpu.memory_space<vmem>>, vector<1x64x32xbf16>
    %161 = vector.shape_cast %160 : vector<1x64x32xbf16> to vector<64x32xbf16>
    %cst_74 = arith.constant dense<0.000000e+00> : vector<16x32xf32>
    %162 = tpu.matmul %159, %161, %cst_74 {dimension_numbers = #tpu.dot_dimension_numbers<[1], [0], [0], [1], [0, 0, 1, 1], [], []>} : vector<16x64xbf16>, vector<64x32xbf16>, vector<16x32xf32> -> vector<16x32xf32>
    %c0_75 = arith.constant 0 : index
    %c0_76 = arith.constant 0 : index
    %c0_77 = arith.constant 0 : index
    %163 = vector.load %arg13[%c0_75, %c0_76, %c0_77] : memref<1x1x32xf32, #tpu.memory_space<vmem>>, vector<1x1x32xf32>
    %164 = vector.shape_cast %163 : vector<1x1x32xf32> to vector<1x32xf32>
    %165 = vector.broadcast %164 : vector<1x32xf32> to vector<16x32xf32>
    %166 = arith.addf %162, %165 : vector<16x32xf32>
    %167 = arith.addf %122, %166 : vector<16x32xf32>
    %168 = vector.shape_cast %167 : vector<16x32xf32> to vector<2x8x32xf32>
    %c0_78 = arith.constant 0 : index
    %c0_79 = arith.constant 0 : index
    %c0_80 = arith.constant 0 : index
    %169 = vector.load %arg15[%c0_78, %c0_79, %c0_80] : memref<2x8x32xf32, #tpu.memory_space<vmem>>, vector<2x8x32xf32>
    tpu.vector_store %arg15[%c0_78, %c0_79, %c0_80], %168 {strides = array<i32>} : memref<2x8x32xf32, #tpu.memory_space<vmem>>, vector<2x8x32xf32>,
    %c1_i32 = arith.constant 1 : i32
    %170 = arith.cmpi eq, %arg1, %c1_i32 : i32
    %171 = arith.extui %170 : i1 to i32
    %c0_i32_81 = arith.constant 0 : i32
    %172 = arith.cmpi ne, %171, %c0_i32_81 : i32
    scf.if %172 {
      %c0_82 = arith.constant 0 : index
      %c0_83 = arith.constant 0 : index
      %c0_84 = arith.constant 0 : index
      %173 = vector.load %arg15[%c0_82, %c0_83, %c0_84] : memref<2x8x32xf32, #tpu.memory_space<vmem>>, vector<2x8x32xf32>
      %c0_85 = arith.constant 0 : index
      %c0_86 = arith.constant 0 : index
      %c0_87 = arith.constant 0 : index
      %174 = vector.load %arg14[%c0_85, %c0_86, %c0_87] : memref<2x8x32xf32, #tpu.memory_space<vmem>>, vector<2x8x32xf32>
      tpu.vector_store %arg14[%c0_85, %c0_86, %c0_87], %173 {strides = array<i32>} : memref<2x8x32xf32, #tpu.memory_space<vmem>>, vector<2x8x32xf32>,
    } else {
    }
    return
  }
  func.func @transform_0(%arg0: i32, %arg1: i32) -> (i32, i32, i32) {
    %c0_i32 = arith.constant 0 : i32
    %c0_i32_0 = arith.constant 0 : i32
    %c0_i32_1 = arith.constant 0 : i32
    return %arg0, %c0_i32, %c0_i32_0 : i32, i32, i32
  }
  func.func @transform_1(%arg0: i32, %arg1: i32) -> (i32, i32, i32) {
    %c0_i32 = arith.constant 0 : i32
    %c0_i32_0 = arith.constant 0 : i32
    %c0_i32_1 = arith.constant 0 : i32
    return %arg1, %c0_i32, %c0_i32_0 : i32, i32, i32
  }
  func.func @transform_2(%arg0: i32, %arg1: i32) -> (i32, i32, i32) {
    %c0_i32 = arith.constant 0 : i32
    %c0_i32_0 = arith.constant 0 : i32
    %c0_i32_1 = arith.constant 0 : i32
    return %arg1, %c0_i32, %c0_i32_0 : i32, i32, i32
  }
  func.func @transform_3(%arg0: i32, %arg1: i32) -> (i32, i32, i32) {
    %c0_i32 = arith.constant 0 : i32
    %c0_i32_0 = arith.constant 0 : i32
    %c0_i32_1 = arith.constant 0 : i32
    return %arg1, %c0_i32, %c0_i32_0 : i32, i32, i32
  }
  func.func @transform_4(%arg0: i32, %arg1: i32) -> (i32, i32, i32) {
    %c0_i32 = arith.constant 0 : i32
    %c0_i32_0 = arith.constant 0 : i32
    %c0_i32_1 = arith.constant 0 : i32
    return %arg1, %c0_i32, %c0_i32_0 : i32, i32, i32
  }
  func.func @transform_5(%arg0: i32, %arg1: i32) -> (i32, i32, i32) {
    %c0_i32 = arith.constant 0 : i32
    %c0_i32_0 = arith.constant 0 : i32
    %c0_i32_1 = arith.constant 0 : i32
    return %arg1, %c0_i32, %c0_i32_0 : i32, i32, i32
  }
  func.func @transform_6(%arg0: i32, %arg1: i32) -> (i32, i32, i32) {
    %c0_i32 = arith.constant 0 : i32
    %c0_i32_0 = arith.constant 0 : i32
    %c0_i32_1 = arith.constant 0 : i32
    return %arg1, %c0_i32, %c0_i32_0 : i32, i32, i32
  }
  func.func @transform_7(%arg0: i32, %arg1: i32) -> (i32, i32, i32) {
    %c0_i32 = arith.constant 0 : i32
    %c0_i32_0 = arith.constant 0 : i32
    %c0_i32_1 = arith.constant 0 : i32
    return %arg1, %c0_i32, %c0_i32_0 : i32, i32, i32
  }
  func.func @transform_8(%arg0: i32, %arg1: i32) -> (i32, i32, i32) {
    %c0_i32 = arith.constant 0 : i32
    %c0_i32_0 = arith.constant 0 : i32
    %c0_i32_1 = arith.constant 0 : i32
    return %arg1, %c0_i32, %c0_i32_0 : i32, i32, i32
  }
  func.func @transform_9(%arg0: i32, %arg1: i32) -> (i32, i32, i32) {
    %c0_i32 = arith.constant 0 : i32
    %c0_i32_0 = arith.constant 0 : i32
    %c0_i32_1 = arith.constant 0 : i32
    return %arg1, %c0_i32, %c0_i32_0 : i32, i32, i32
  }
  func.func @transform_10(%arg0: i32, %arg1: i32) -> (i32, i32, i32) {
    %c0_i32 = arith.constant 0 : i32
    %c0_i32_0 = arith.constant 0 : i32
    %c0_i32_1 = arith.constant 0 : i32
    return %arg1, %c0_i32, %c0_i32_0 : i32, i32, i32
  }
  func.func @transform_11(%arg0: i32, %arg1: i32) -> (i32, i32, i32) {
    %c0_i32 = arith.constant 0 : i32
    %c0_i32_0 = arith.constant 0 : i32
    %c0_i32_1 = arith.constant 0 : i32
    return %arg1, %c0_i32, %c0_i32_0 : i32, i32, i32
  }
  func.func @transform_12(%arg0: i32, %arg1: i32) -> (i32, i32, i32) {
    %c0_i32 = arith.constant 0 : i32
    %c0_i32_0 = arith.constant 0 : i32
    %c0_i32_1 = arith.constant 0 : i32
    return %arg0, %c0_i32, %c0_i32_0 : i32, i32, i32
  }
}

</mosaic_0001>

<llo_original>
// kernel: tpu_custom_call.1
$region0: #{tpu_custom_call.1}
  #allocation0 [shape = 'u32[]', space=smem, size = 0x4, offset = 0x4, fixed_abs, tag = 'smem constant byte address 0x4 - core index']
  #allocation1 [shape = 'u32[144,128]{1,0:T(1,128)}', space=vmem, size = 0x12000, scoped, tag = 'internal scratch']
  #allocation2 [shape = 'f32[2,8,32]{2,1,0:T(8,128)}', space=vmem, size = 0x2000, scoped, tag = 'scratch operand']
  #allocation3 [shape = 'f32[2,8,32]{2,1,0:T(8,128)}', space=vmem, size = 0x2000, scoped, tag = 'scratch operand']
  %s0 = inlined_call_operand.hbm [shape: f32[2,8,32], index: 0, kind: input, shape index: {}]
  %s1 = inlined_call_operand.vmem [shape: f32[2,1,32], index: 1, kind: input, shape index: {}]
  %s2 = inlined_call_operand.vmem [shape: f32[2,1,32], index: 2, kind: input, shape index: {}]
  %s3 = inlined_call_operand.vmem [shape: bf16[2,32,96], index: 3, kind: input, shape index: {}]
  %s4 = inlined_call_operand.vmem [shape: bf16[2,32,32], index: 4, kind: input, shape index: {}]
  %s5 = inlined_call_operand.hbm [shape: f32[2,1,32], index: 5, kind: input, shape index: {}]
  %s6 = inlined_call_operand.hbm [shape: f32[2,1,32], index: 6, kind: input, shape index: {}]
  %s7 = inlined_call_operand.hbm [shape: f32[2,1,32], index: 7, kind: input, shape index: {}]
  %s8 = inlined_call_operand.vmem [shape: bf16[2,32,64], index: 8, kind: input, shape index: {}]
  %s9 = inlined_call_operand.hbm [shape: f32[2,1,64], index: 9, kind: input, shape index: {}]
  %s10 = inlined_call_operand.vmem [shape: bf16[2,64,32], index: 10, kind: input, shape index: {}]
  %s11 = inlined_call_operand.vmem [shape: f32[2,1,32], index: 11, kind: input, shape index: {}]
  %s12 = inlined_call_operand.hbm [shape: f32[2,8,32], index: 12, kind: output, shape index: {}]
  %s13 = sld [smem:[#allocation0]]
  $region109: #{tpu_custom_call.1} parent=0
    _
  %s15 = ssub.s32 1, %s13
  %s16 = scalar_select 0, %s15, %s13
  $region1: #{tpu_custom_call.1} parent=0
    #allocation4 [shape = 'u8[8192]{0}', space=vmem, size = 0x2000, scoped, tag = 'input window, operand 0, single buffered']
    #allocation5 [shape = 's32[2]{0}', space=sflag, size = 0x8, scoped, tag = 'scoped memory for tpu_custom_call.1']
    #allocation6 [shape = 's32[2]{0}', space=sflag, size = 0x8, scoped, tag = 'scoped memory for tpu_custom_call.1']
    #allocation7 [shape = 'u8[1024]{0}', space=vmem, size = 0x400, scoped, tag = 'input window, operand 5']
    #allocation8 [shape = 's32[2]{0}', space=sflag, size = 0x8, scoped, tag = 'scoped memory for tpu_custom_call.1']
    #allocation9 [shape = 'u8[1024]{0}', space=vmem, size = 0x400, scoped, tag = 'input window, operand 6']
    #allocation10 [shape = 'u8[1024]{0}', space=vmem, size = 0x400, scoped, tag = 'input window, operand 7']
    #allocation11 [shape = 's32[2]{0}', space=sflag, size = 0x8, scoped, tag = 'scoped memory for tpu_custom_call.1']
    #allocation12 [shape = 'u8[1024]{0}', space=vmem, size = 0x400, scoped, tag = 'input window, operand 9']
    #allocation13 [shape = 'u8[8192]{0}', space=vmem, size = 0x2000, scoped, tag = 'output window, operand 0, single buffered']
    %17 = vsyncpa [#allocation5], 0
    %18 = vsyncpa [#allocation8], 0
    %s19 = scalar_lea.sflag [#allocation8], 1
    %20 = vsyncpa %s19, 0
    %21 = vsyncpa [#allocation11], 0
    %s22 = scalar_lea.sflag [#allocation11], 1
    %23 = vsyncpa %s22, 0
    %24 = vsyncpa [#allocation6], 0
    loop: start=0, step=1, limit=4
    $region2: #{tpu_custom_call.1} parent=1 // loop_pre_header
      _
    $region3: #{tpu_custom_call.1} parent=1 // loop_header
      %s26 = sphi 0, %s30
      %p27 = scmp.ge.s32.totalorder %s26, 4
      %s33 = sphi 0, %s45
      %s34 = sphi 0, %s41
      %s35 = sphi 0, %s33
      %s36 = sphi 0, %s34
      %s37 = sphi 0, %s35
      %s38 = sphi 0, %s36
      %s48 = sphi 0, %s50
      %s51 = sphi 0, %s48
      %s52 = sphi 0, %s51
      %s68 = sphi 0, %s52
      %s74 = sphi 0, %s76
      %s77 = sphi 0, %s74
      %s78 = sphi 0, %s77
      %s94 = sphi 0, %s78
      %s100 = sphi 0, %s102
      %s103 = sphi 0, %s100
      %s104 = sphi 0, %s103
      %s120 = sphi 0, %s104
      %s126 = sphi 0, %s128
      %s129 = sphi 0, %s126
      %s130 = sphi 0, %s129
      %s146 = sphi 0, %s130
      %s152 = sphi 0, %s154
      %s155 = sphi 0, %s152
      %s156 = sphi 0, %s155
      %s172 = sphi 0, %s156
      %s178 = sphi 0, %s180
      %s181 = sphi 0, %s178
      %s182 = sphi 0, %s181
      %s198 = sphi 0, %s182
      %s204 = sphi 0, %s206
      %s207 = sphi 0, %s204
      %s208 = sphi 0, %s207
      %s224 = sphi 0, %s208
      %s230 = sphi 0, %s232
      %s233 = sphi 0, %s230
      %s234 = sphi 0, %s233
      %s250 = sphi 0, %s234
      %s256 = sphi 0, %s258
      %s259 = sphi 0, %s256
      %s260 = sphi 0, %s259
      %s276 = sphi 0, %s260
      %s282 = sphi 0, %s284
      %s285 = sphi 0, %s282
      %s286 = sphi 0, %s285
      %s302 = sphi 0, %s286
      %s308 = sphi 0, %s310
      %s311 = sphi 0, %s308
      %s312 = sphi 0, %s311
      %s328 = sphi 0, %s312
      %s334 = sphi 0, %s336
      %s337 = sphi 0, %s334
      %s338 = sphi 0, %s337
      %s354 = sphi 0, %s338
      %s360 = sphi 0, %s362
      %s363 = sphi 0, %s360
      %s364 = sphi 0, %s363
      %s380 = sphi 0, %s364
    $region4: #{tpu_custom_call.1} parent=1 // loop_header_branch
      %29 = sbr.rel (%p27) target = $region8
    $region5: #{tpu_custom_call.1} parent=1 // loop_body
      %s31 = ssub.s32 %s26, 1
      %s32 = ssub.s32 %s26, 2
      %s39 = sadd.s32 1, %s34
      %p40 = scmp.ge.s32.totalorder %s39, 2
      %s41 = scalar_select %p40, 0, %s39
      %s42 = sadd.s32 1, %s33
      %s43 = scalar_select %p40, %s42, %s33
      %p44 = scmp.ge.s32.totalorder %s43, 1
      %s45 = scalar_select %p44, 0, %s43
      %s46 = ssub.s32 %s33, %s45
      %p47 = scmp.eq.s32.totalorder %s46, 0
      %s49 = sadd.s32 %s48, 1
      %s50 = scalar_select %p47, %s48, %s49
      %p53 = pneg %p47
      %p54 = scmp.eq.s32.totalorder %s26, 1
      %p55 = por %p53, %p54
      %p56 = scmp.ne.s32.totalorder %s48, %s51
      %p57 = scmp.eq.s32.totalorder %s26, 0
      %p58 = por %p56, %p57
      %p59 = scmp.ne.s32.totalorder %s48, %s51
      %p60 = scmp.eq.s32.totalorder %s31, 1
      %p61 = por %p59, %p60
      %p62 = scmp.ne.s32.totalorder %s51, %s52
      %p63 = scmp.eq.s32.totalorder %s31, 0
      %p64 = por %p62, %p63
      %p65 = scmp.ne.s32.totalorder %s51, %s52
      %p66 = scmp.eq.s32.totalorder %s32, 1
      %p67 = por %p65, %p66
      %p69 = scmp.ne.s32.totalorder %s52, %s68
      %p70 = scmp.eq.s32.totalorder %s32, 0
      %p71 = por %p69, %p70
      %s72 = ssub.s32 %s34, %s41
      %p73 = scmp.eq.s32.totalorder %s72, 0
      %s75 = sadd.s32 %s74, 1
      %s76 = scalar_select %p73, %s74, %s75
      %p79 = pneg %p73
      %p80 = scmp.eq.s32.totalorder %s26, 1
      %p81 = por %p79, %p80
      %p82 = scmp.ne.s32.totalorder %s74, %s77
      %p83 = scmp.eq.s32.totalorder %s26, 0
      %p84 = por %p82, %p83
      %p85 = scmp.ne.s32.totalorder %s74, %s77
      %p86 = scmp.eq.s32.totalorder %s31, 1
      %p87 = por %p85, %p86
      %p88 = scmp.ne.s32.totalorder %s77, %s78
      %p89 = scmp.eq.s32.totalorder %s31, 0
      %p90 = por %p88, %p89
      %p91 = scmp.ne.s32.totalorder %s77, %s78
      %p92 = scmp.eq.s32.totalorder %s32, 1
      %p93 = por %p91, %p92
      %p95 = scmp.ne.s32.totalorder %s78, %s94
      %p96 = scmp.eq.s32.totalorder %s32, 0
      %p97 = por %p95, %p96
      %s98 = ssub.s32 %s34, %s41
      %p99 = scmp.eq.s32.totalorder %s98, 0
      %s101 = sadd.s32 %s100, 1
      %s102 = scalar_select %p99, %s100, %s101
      %p105 = pneg %p99
      %p106 = scmp.eq.s32.totalorder %s26, 1
      %p107 = por %p105, %p106
      %p108 = scmp.ne.s32.totalorder %s100, %s103
      %p109 = scmp.eq.s32.totalorder %s26, 0
      %p110 = por %p108, %p109
      %p111 = scmp.ne.s32.totalorder %s100, %s103
      %p112 = scmp.eq.s32.totalorder %s31, 1
      %p113 = por %p111, %p112
      %p114 = scmp.ne.s32.totalorder %s103, %s104
      %p115 = scmp.eq.s32.totalorder %s31, 0
      %p116 = por %p114, %p115
      %p117 = scmp.ne.s32.totalorder %s103, %s104
      %p118 = scmp.eq.s32.totalorder %s32, 1
      %p119 = por %p117, %p118
      %p121 = scmp.ne.s32.totalorder %s104, %s120
      %p122 = scmp.eq.s32.totalorder %s32, 0
      %p123 = por %p121, %p122
      %s124 = ssub.s32 %s34, %s41
      %p125 = scmp.eq.s32.totalorder %s124, 0
      %s127 = sadd.s32 %s126, 1
      %s128 = scalar_select %p125, %s126, %s127
      %p131 = pneg %p125
      %p132 = scmp.eq.s32.totalorder %s26, 1
      %p133 = por %p131, %p132
      %p134 = scmp.ne.s32.totalorder %s126, %s129
      %p135 = scmp.eq.s32.totalorder %s26, 0
      %p136 = por %p134, %p135
      %p137 = scmp.ne.s32.totalorder %s126, %s129
      %p138 = scmp.eq.s32.totalorder %s31, 1
      %p139 = por %p137, %p138
      %p140 = scmp.ne.s32.totalorder %s129, %s130
      %p141 = scmp.eq.s32.totalorder %s31, 0
      %p142 = por %p140, %p141
      %p143 = scmp.ne.s32.totalorder %s129, %s130
      %p144 = scmp.eq.s32.totalorder %s32, 1
      %p145 = por %p143, %p144
      %p147 = scmp.ne.s32.totalorder %s130, %s146
      %p148 = scmp.eq.s32.totalorder %s32, 0
      %p149 = por %p147, %p148
      %s150 = ssub.s32 %s34, %s41
      %p151 = scmp.eq.s32.totalorder %s150, 0
      %s153 = sadd.s32 %s152, 1
      %s154 = scalar_select %p151, %s152, %s153
      %p157 = pneg %p151
      %p158 = scmp.eq.s32.totalorder %s26, 1
      %p159 = por %p157, %p158
      %p160 = scmp.ne.s32.totalorder %s152, %s155
      %p161 = scmp.eq.s32.totalorder %s26, 0
      %p162 = por %p160, %p161
      %p163 = scmp.ne.s32.totalorder %s152, %s155
      %p164 = scmp.eq.s32.totalorder %s31, 1
      %p165 = por %p163, %p164
      %p166 = scmp.ne.s32.totalorder %s155, %s156
      %p167 = scmp.eq.s32.totalorder %s31, 0
      %p168 = por %p166, %p167
      %p169 = scmp.ne.s32.totalorder %s155, %s156
      %p170 = scmp.eq.s32.totalorder %s32, 1
      %p171 = por %p169, %p170
      %p173 = scmp.ne.s32.totalorder %s156, %s172
      %p174 = scmp.eq.s32.totalorder %s32, 0
      %p175 = por %p173, %p174
      %s176 = ssub.s32 %s34, %s41
      %p177 = scmp.eq.s32.totalorder %s176, 0
      %s179 = sadd.s32 %s178, 1
      %s180 = scalar_select %p177, %s178, %s179
      %p183 = pneg %p177
      %p184 = scmp.eq.s32.totalorder %s26, 1
      %p185 = por %p183, %p184
      %p186 = scmp.ne.s32.totalorder %s178, %s181
      %p187 = scmp.eq.s32.totalorder %s26, 0
      %p188 = por %p186, %p187
      %p189 = scmp.ne.s32.totalorder %s178, %s181
      %p190 = scmp.eq.s32.totalorder %s31, 1
      %p191 = por %p189, %p190
      %p192 = scmp.ne.s32.totalorder %s181, %s182
      %p193 = scmp.eq.s32.totalorder %s31, 0
      %p194 = por %p192, %p193
      %p195 = scmp.ne.s32.totalorder %s181, %s182
      %p196 = scmp.eq.s32.totalorder %s32, 1
      %p197 = por %p195, %p196
      %p199 = scmp.ne.s32.totalorder %s182, %s198
      %p200 = scmp.eq.s32.totalorder %s32, 0
      %p201 = por %p199, %p200
      %s202 = ssub.s32 %s34, %s41
      %p203 = scmp.eq.s32.totalorder %s202, 0
      %s205 = sadd.s32 %s204, 1
      %s206 = scalar_select %p203, %s204, %s205
      %p209 = pneg %p203
      %p210 = scmp.eq.s32.totalorder %s26, 1
      %p211 = por %p209, %p210
      %p212 = scmp.ne.s32.totalorder %s204, %s207
      %p213 = scmp.eq.s32.totalorder %s26, 0
      %p214 = por %p212, %p213
      %p215 = scmp.ne.s32.totalorder %s204, %s207
      %p216 = scmp.eq.s32.totalorder %s31, 1
      %p217 = por %p215, %p216
      %p218 = scmp.ne.s32.totalorder %s207, %s208
      %p219 = scmp.eq.s32.totalorder %s31, 0
      %p220 = por %p218, %p219
      %p221 = scmp.ne.s32.totalorder %s207, %s208
      %p222 = scmp.eq.s32.totalorder %s32, 1
      %p223 = por %p221, %p222
      %p225 = scmp.ne.s32.totalorder %s208, %s224
      %p226 = scmp.eq.s32.totalorder %s32, 0
      %p227 = por %p225, %p226
      %s228 = ssub.s32 %s34, %s41
      %p229 = scmp.eq.s32.totalorder %s228, 0
      %s231 = sadd.s32 %s230, 1
      %s232 = scalar_select %p229, %s230, %s231
      %p235 = pneg %p229
      %p236 = scmp.eq.s32.totalorder %s26, 1
      %p237 = por %p235, %p236
      %p238 = scmp.ne.s32.totalorder %s230, %s233
      %p239 = scmp.eq.s32.totalorder %s26, 0
      %p240 = por %p238, %p239
      %p241 = scmp.ne.s32.totalorder %s230, %s233
      %p242 = scmp.eq.s32.totalorder %s31, 1
      %p243 = por %p241, %p242
      %p244 = scmp.ne.s32.totalorder %s233, %s234
      %p245 = scmp.eq.s32.totalorder %s31, 0
      %p246 = por %p244, %p245
      %p247 = scmp.ne.s32.totalorder %s233, %s234
      %p248 = scmp.eq.s32.totalorder %s32, 1
      %p249 = por %p247, %p248
      %p251 = scmp.ne.s32.totalorder %s234, %s250
      %p252 = scmp.eq.s32.totalorder %s32, 0
      %p253 = por %p251, %p252
      %s254 = ssub.s32 %s34, %s41
      %p255 = scmp.eq.s32.totalorder %s254, 0
      %s257 = sadd.s32 %s256, 1
      %s258 = scalar_select %p255, %s256, %s257
      %p261 = pneg %p255
      %p262 = scmp.eq.s32.totalorder %s26, 1
      %p263 = por %p261, %p262
      %p264 = scmp.ne.s32.totalorder %s256, %s259
      %p265 = scmp.eq.s32.totalorder %s26, 0
      %p266 = por %p264, %p265
      %p267 = scmp.ne.s32.totalorder %s256, %s259
      %p268 = scmp.eq.s32.totalorder %s31, 1
      %p269 = por %p267, %p268
      %p270 = scmp.ne.s32.totalorder %s259, %s260
      %p271 = scmp.eq.s32.totalorder %s31, 0
      %p272 = por %p270, %p271
      %p273 = scmp.ne.s32.totalorder %s259, %s260
      %p274 = scmp.eq.s32.totalorder %s32, 1
      %p275 = por %p273, %p274
      %p277 = scmp.ne.s32.totalorder %s260, %s276
      %p278 = scmp.eq.s32.totalorder %s32, 0
      %p279 = por %p277, %p278
      %s280 = ssub.s32 %s34, %s41
      %p281 = scmp.eq.s32.totalorder %s280, 0
      %s283 = sadd.s32 %s282, 1
      %s284 = scalar_select %p281, %s282, %s283
      %p287 = pneg %p281
      %p288 = scmp.eq.s32.totalorder %s26, 1
      %p289 = por %p287, %p288
      %p290 = scmp.ne.s32.totalorder %s282, %s285
      %p291 = scmp.eq.s32.totalorder %s26, 0
      %p292 = por %p290, %p291
      %p293 = scmp.ne.s32.totalorder %s282, %s285
      %p294 = scmp.eq.s32.totalorder %s31, 1
      %p295 = por %p293, %p294
      %p296 = scmp.ne.s32.totalorder %s285, %s286
      %p297 = scmp.eq.s32.totalorder %s31, 0
      %p298 = por %p296, %p297
      %p299 = scmp.ne.s32.totalorder %s285, %s286
      %p300 = scmp.eq.s32.totalorder %s32, 1
      %p301 = por %p299, %p300
      %p303 = scmp.ne.s32.totalorder %s286, %s302
      %p304 = scmp.eq.s32.totalorder %s32, 0
      %p305 = por %p303, %p304
      %s306 = ssub.s32 %s34, %s41
      %p307 = scmp.eq.s32.totalorder %s306, 0
      %s309 = sadd.s32 %s308, 1
      %s310 = scalar_select %p307, %s308, %s309
      %p313 = pneg %p307
      %p314 = scmp.eq.s32.totalorder %s26, 1
      %p315 = por %p313, %p314
      %p316 = scmp.ne.s32.totalorder %s308, %s311
      %p317 = scmp.eq.s32.totalorder %s26, 0
      %p318 = por %p316, %p317
      %p319 = scmp.ne.s32.totalorder %s308, %s311
      %p320 = scmp.eq.s32.totalorder %s31, 1
      %p321 = por %p319, %p320
      %p322 = scmp.ne.s32.totalorder %s311, %s312
      %p323 = scmp.eq.s32.totalorder %s31, 0
      %p324 = por %p322, %p323
      %p325 = scmp.ne.s32.totalorder %s311, %s312
      %p326 = scmp.eq.s32.totalorder %s32, 1
      %p327 = por %p325, %p326
      %p329 = scmp.ne.s32.totalorder %s312, %s328
      %p330 = scmp.eq.s32.totalorder %s32, 0
      %p331 = por %p329, %p330
      %s332 = ssub.s32 %s34, %s41
      %p333 = scmp.eq.s32.totalorder %s332, 0
      %s335 = sadd.s32 %s334, 1
      %s336 = scalar_select %p333, %s334, %s335
      %p339 = pneg %p333
      %p340 = scmp.eq.s32.totalorder %s26, 1
      %p341 = por %p339, %p340
      %p342 = scmp.ne.s32.totalorder %s334, %s337
      %p343 = scmp.eq.s32.totalorder %s26, 0
      %p344 = por %p342, %p343
      %p345 = scmp.ne.s32.totalorder %s334, %s337
      %p346 = scmp.eq.s32.totalorder %s31, 1
      %p347 = por %p345, %p346
      %p348 = scmp.ne.s32.totalorder %s337, %s338
      %p349 = scmp.eq.s32.totalorder %s31, 0
      %p350 = por %p348, %p349
      %p351 = scmp.ne.s32.totalorder %s337, %s338
      %p352 = scmp.eq.s32.totalorder %s32, 1
      %p353 = por %p351, %p352
      %p355 = scmp.ne.s32.totalorder %s338, %s354
      %p356 = scmp.eq.s32.totalorder %s32, 0
      %p357 = por %p355, %p356
      %s358 = ssub.s32 %s33, %s45
      %p359 = scmp.eq.s32.totalorder %s358, 0
      %s361 = sadd.s32 %s360, 1
      %s362 = scalar_select %p359, %s360, %s361
      %p365 = pneg %p359
      %p366 = scmp.eq.s32.totalorder %s26, 1
      %p367 = por %p365, %p366
      %p368 = scmp.ne.s32.totalorder %s360, %s363
      %p369 = scmp.eq.s32.totalorder %s26, 0
      %p370 = por %p368, %p369
      %p371 = scmp.ne.s32.totalorder %s360, %s363
      %p372 = scmp.eq.s32.totalorder %s31, 1
      %p373 = por %p371, %p372
      %p374 = scmp.ne.s32.totalorder %s363, %s364
      %p375 = scmp.eq.s32.totalorder %s31, 0
      %p376 = por %p374, %p375
      %p377 = scmp.ne.s32.totalorder %s363, %s364
      %p378 = scmp.eq.s32.totalorder %s32, 1
      %p379 = por %p377, %p378
      %p381 = scmp.ne.s32.totalorder %s364, %s380
      %p382 = scmp.eq.s32.totalorder %s32, 0
      %p383 = por %p381, %p382
      %p384 = scmp.le.s32.totalorder 1, %s26
      %p385 = scmp.lt.s32.totalorder %s26, 3
      %p386 = pnand %p384, %p385
      %p387 = pneg %p386
      // Predicated region
      $region9: #{tpu_custom_call.1} parent=5 // pred_check
        _
      $region10: #{tpu_custom_call.1} parent=5 // pred_check_branch
        %389 = sbr.rel (%p386) target = $region12
      $region11: #{tpu_custom_call.1} parent=5 // pred_region
        %s390 = ssub.s32 %s26, 1
        // Predicated region
        $region13: #{tpu_custom_call.1} parent=11 // pred_check
          %p391 = pneg %p64
        $region14: #{tpu_custom_call.1} parent=11 // pred_check_branch
          %393 = sbr.rel (%p391) target = $region16
        $region15: #{tpu_custom_call.1} parent=11 // pred_region
          %s394 = smul.u32 2, %s35
          %s396 = ssub.s32 256, 256
          %397 = vsyncadd [#allocation5], %s396
          %s398 = smul.addr %s394, 128
          %s399 = scalar_lea.hbm %s0, %s398
          %s400 = sshll.u32 [#allocation4], 4
          %s401 = int_to_ptr.vmem [resolvable:$true] %s400
          %406 = dma.hbm_to_vmem [thread:$0]  %s399, 256, %s401, [#allocation5], 128, 128, 8
        $region16: #{tpu_custom_call.1} parent=11 // pred_fallthru
          _
      $region12: #{tpu_custom_call.1} parent=5 // pred_fallthru
        _
      %p407 = scmp.lt.s32.totalorder %s26, 2
      // Predicated region
      $region17: #{tpu_custom_call.1} parent=5 // pred_check
        %p408 = pneg %p407
      $region18: #{tpu_custom_call.1} parent=5 // pred_check_branch
        %410 = sbr.rel (%p408) target = $region20
      $region19: #{tpu_custom_call.1} parent=5 // pred_region
        // Predicated region
        $region21: #{tpu_custom_call.1} parent=19 // pred_check
          %p411 = pneg %p84
        $region22: #{tpu_custom_call.1} parent=19 // pred_check_branch
          %413 = sbr.rel (%p411) target = $region24
        $region23: #{tpu_custom_call.1} parent=19 // pred_region
          %p414 = scmp.lt.s32.totalorder %s34, 1
          %s415 = scalar_select %p414, %s34, 1
          %s416 = scalar_lea.vmem %s1, %s415
        $region24: #{tpu_custom_call.1} parent=19 // pred_fallthru
          _
        // Predicated region
        $region25: #{tpu_custom_call.1} parent=19 // pred_check
          %p417 = pneg %p110
        $region26: #{tpu_custom_call.1} parent=19 // pred_check_branch
          %419 = sbr.rel (%p417) target = $region28
        $region27: #{tpu_custom_call.1} parent=19 // pred_region
          %p420 = scmp.lt.s32.totalorder %s34, 1
          %s421 = scalar_select %p420, %s34, 1
          %s422 = scalar_lea.vmem %s2, %s421
        $region28: #{tpu_custom_call.1} parent=19 // pred_fallthru
          _
        // Predicated region
        $region29: #{tpu_custom_call.1} parent=19 // pred_check
          %p423 = pneg %p136
        $region30: #{tpu_custom_call.1} parent=19 // pred_check_branch
          %425 = sbr.rel (%p423) target = $region32
        $region31: #{tpu_custom_call.1} parent=19 // pred_region
          %p426 = scmp.lt.s32.totalorder %s34, 1
          %s427 = scalar_select %p426, %s34, 1
          %s428 = smul.addr %s427, 4
          %s429 = smul.addr %s428, 4
          %s430 = scalar_lea.vmem %s3, %s429
        $region32: #{tpu_custom_call.1} parent=19 // pred_fallthru
          _
        // Predicated region
        $region33: #{tpu_custom_call.1} parent=19 // pred_check
          %p431 = pneg %p162
        $region34: #{tpu_custom_call.1} parent=19 // pred_check_branch
          %433 = sbr.rel (%p431) target = $region36
        $region35: #{tpu_custom_call.1} parent=19 // pred_region
          %p434 = scmp.lt.s32.totalorder %s34, 1
          %s435 = scalar_select %p434, %s34, 1
          %s436 = smul.addr %s435, 4
          %s437 = smul.addr %s436, 4
          %s438 = scalar_lea.vmem %s4, %s437
        $region36: #{tpu_custom_call.1} parent=19 // pred_fallthru
          _
        // Predicated region
        $region37: #{tpu_custom_call.1} parent=19 // pred_check
          %p439 = pneg %p188
        $region38: #{tpu_custom_call.1} parent=19 // pred_check_branch
          %441 = sbr.rel (%p439) target = $region40
        $region39: #{tpu_custom_call.1} parent=19 // pred_region
          %s442 = sand.u32 %s26, 1
          %s443 = scalar_lea.sflag [#allocation8], %s442
          %s444 = sand.u32 %s178, 1
          %s445 = scalar_lea.vmem [#allocation7], %s444
          %s447 = ssub.s32 16, 16
          %448 = vsyncadd %s443, %s447
          %s449 = smul.addr %s34, 16
          %s450 = scalar_lea.hbm %s5, %s449
          %s452 = sshll.u32 %s445, 4
          %s453 = int_to_ptr.vmem [resolvable:$true] %s452
          %455 = dma.hbm_to_vmem [thread:$0]  %s450, 16, %s453, %s443
        $region40: #{tpu_custom_call.1} parent=19 // pred_fallthru
          _
        // Predicated region
        $region41: #{tpu_custom_call.1} parent=19 // pred_check
          %p456 = pneg %p214
        $region42: #{tpu_custom_call.1} parent=19 // pred_check_branch
          %458 = sbr.rel (%p456) target = $region44
        $region43: #{tpu_custom_call.1} parent=19 // pred_region
          %s459 = sand.u32 %s26, 1
          %s460 = scalar_lea.sflag [#allocation8], %s459
          %s461 = sand.u32 %s204, 1
          %s462 = scalar_lea.vmem [#allocation9], %s461
          %s464 = ssub.s32 16, 16
          %465 = vsyncadd %s460, %s464
          %s466 = smul.addr %s34, 16
          %s467 = scalar_lea.hbm %s6, %s466
          %s469 = sshll.u32 %s462, 4
          %s470 = int_to_ptr.vmem [resolvable:$true] %s469
          %472 = dma.hbm_to_vmem [thread:$0]  %s467, 16, %s470, %s460
        $region44: #{tpu_custom_call.1} parent=19 // pred_fallthru
          _
        // Predicated region
        $region45: #{tpu_custom_call.1} parent=19 // pred_check
          %p473 = pneg %p240
        $region46: #{tpu_custom_call.1} parent=19 // pred_check_branch
          %475 = sbr.rel (%p473) target = $region48
        $region47: #{tpu_custom_call.1} parent=19 // pred_region
          %s476 = sand.u32 %s26, 1
          %s477 = scalar_lea.sflag [#allocation11], %s476
          %s478 = sand.u32 %s230, 1
          %s479 = scalar_lea.vmem [#allocation10], %s478
          %s481 = ssub.s32 16, 16
          %482 = vsyncadd %s477, %s481
          %s483 = smul.addr %s34, 16
          %s484 = scalar_lea.hbm %s7, %s483
          %s486 = sshll.u32 %s479, 4
          %s487 = int_to_ptr.vmem [resolvable:$true] %s486
          %489 = dma.hbm_to_vmem [thread:$0]  %s484, 16, %s487, %s477
        $region48: #{tpu_custom_call.1} parent=19 // pred_fallthru
          _
        // Predicated region
        $region49: #{tpu_custom_call.1} parent=19 // pred_check
          %p490 = pneg %p266
        $region50: #{tpu_custom_call.1} parent=19 // pred_check_branch
          %492 = sbr.rel (%p490) target = $region52
        $region51: #{tpu_custom_call.1} parent=19 // pred_region
          %p493 = scmp.lt.s32.totalorder %s34, 1
          %s494 = scalar_select %p493, %s34, 1
          %s495 = smul.addr %s494, 4
          %s496 = smul.addr %s495, 4
          %s497 = scalar_lea.vmem %s8, %s496
        $region52: #{tpu_custom_call.1} parent=19 // pred_fallthru
          _
        // Predicated region
        $region53: #{tpu_custom_call.1} parent=19 // pred_check
          %p498 = pneg %p292
        $region54: #{tpu_custom_call.1} parent=19 // pred_check_branch
          %500 = sbr.rel (%p498) target = $region56
        $region55: #{tpu_custom_call.1} parent=19 // pred_region
          %s501 = sand.u32 %s26, 1
          %s502 = scalar_lea.sflag [#allocation11], %s501
          %s503 = sand.u32 %s282, 1
          %s504 = scalar_lea.vmem [#allocation12], %s503
          %s506 = ssub.s32 16, 16
          %507 = vsyncadd %s502, %s506
          %s508 = smul.addr %s34, 16
          %s509 = scalar_lea.hbm %s9, %s508
          %s511 = sshll.u32 %s504, 4
          %s512 = int_to_ptr.vmem [resolvable:$true] %s511
          %514 = dma.hbm_to_vmem [thread:$0]  %s509, 16, %s512, %s502
        $region56: #{tpu_custom_call.1} parent=19 // pred_fallthru
          _
        // Predicated region
        $region57: #{tpu_custom_call.1} parent=19 // pred_check
          %p515 = pneg %p318
        $region58: #{tpu_custom_call.1} parent=19 // pred_check_branch
          %517 = sbr.rel (%p515) target = $region60
        $region59: #{tpu_custom_call.1} parent=19 // pred_region
          %p518 = scmp.lt.s32.totalorder %s34, 1
          %s519 = scalar_select %p518, %s34, 1
          %s520 = smul.addr %s519, 8
          %s521 = smul.addr %s520, 4
          %s522 = scalar_lea.vmem %s10, %s521
        $region60: #{tpu_custom_call.1} parent=19 // pred_fallthru
          _
        // Predicated region
        $region61: #{tpu_custom_call.1} parent=19 // pred_check
          %p523 = pneg %p344
        $region62: #{tpu_custom_call.1} parent=19 // pred_check_branch
          %525 = sbr.rel (%p523) target = $region64
        $region63: #{tpu_custom_call.1} parent=19 // pred_region
          %p526 = scmp.lt.s32.totalorder %s34, 1
          %s527 = scalar_select %p526, %s34, 1
          %s528 = scalar_lea.vmem %s11, %s527
        $region64: #{tpu_custom_call.1} parent=19 // pred_fallthru
          _
      $region20: #{tpu_custom_call.1} parent=5 // pred_fallthru
        _
      %p529 = scmp.le.s32.totalorder 1, %s26
      %p530 = scmp.lt.s32.totalorder %s26, 3
      %p531 = pnand %p529, %p530
      %p532 = pneg %p531
      // Predicated region
      $region65: #{tpu_custom_call.1} parent=5 // pred_check
        _
      $region66: #{tpu_custom_call.1} parent=5 // pred_check_branch
        %534 = sbr.rel (%p531) target = $region68
      $region67: #{tpu_custom_call.1} parent=5 // pred_region
        %s535 = ssub.s32 %s26, 1
        // Predicated region
        $region69: #{tpu_custom_call.1} parent=67 // pred_check
          %p536 = pneg %p64
        $region70: #{tpu_custom_call.1} parent=67 // pred_check_branch
          %538 = sbr.rel (%p536) target = $region72
        $region71: #{tpu_custom_call.1} parent=67 // pred_region
          %539 = dma.done [#allocation5], 256
        $region72: #{tpu_custom_call.1} parent=67 // pred_fallthru
          _
        %s540 = sand.u32 %s31, 1
        %s541 = scalar_lea.sflag [#allocation8], %s540
        %s542 = sand.u32 %s181, 1
        %s543 = scalar_lea.vmem [#allocation7], %s542
        // Predicated region
        $region73: #{tpu_custom_call.1} parent=67 // pred_check
          %p544 = pneg %p194
        $region74: #{tpu_custom_call.1} parent=67 // pred_check_branch
          %546 = sbr.rel (%p544) target = $region76
        $region75: #{tpu_custom_call.1} parent=67 // pred_region
          %547 = dma.done %s541, 16
        $region76: #{tpu_custom_call.1} parent=67 // pred_fallthru
          _
        %s548 = sand.u32 %s31, 1
        %s549 = scalar_lea.sflag [#allocation8], %s548
        %s550 = sand.u32 %s207, 1
        %s551 = scalar_lea.vmem [#allocation9], %s550
        // Predicated region
        $region77: #{tpu_custom_call.1} parent=67 // pred_check
          %p552 = pneg %p220
        $region78: #{tpu_custom_call.1} parent=67 // pred_check_branch
          %554 = sbr.rel (%p552) target = $region80
        $region79: #{tpu_custom_call.1} parent=67 // pred_region
          %555 = dma.done %s549, 16
        $region80: #{tpu_custom_call.1} parent=67 // pred_fallthru
          _
        %s556 = sand.u32 %s31, 1
        %s557 = scalar_lea.sflag [#allocation11], %s556
        %s558 = sand.u32 %s233, 1
        %s559 = scalar_lea.vmem [#allocation10], %s558
        // Predicated region
        $region81: #{tpu_custom_call.1} parent=67 // pred_check
          %p560 = pneg %p246
        $region82: #{tpu_custom_call.1} parent=67 // pred_check_branch
          %562 = sbr.rel (%p560) target = $region84
        $region83: #{tpu_custom_call.1} parent=67 // pred_region
          %563 = dma.done %s557, 16
        $region84: #{tpu_custom_call.1} parent=67 // pred_fallthru
          _
        %s564 = sand.u32 %s31, 1
        %s565 = scalar_lea.sflag [#allocation11], %s564
        %s566 = sand.u32 %s285, 1
        %s567 = scalar_lea.vmem [#allocation12], %s566
        // Predicated region
        $region85: #{tpu_custom_call.1} parent=67 // pred_check
          %p568 = pneg %p298
        $region86: #{tpu_custom_call.1} parent=67 // pred_check_branch
          %570 = sbr.rel (%p568) target = $region88
        $region87: #{tpu_custom_call.1} parent=67 // pred_region
          %571 = dma.done %s565, 16
        $region88: #{tpu_custom_call.1} parent=67 // pred_fallthru
          _
        %p572 = pneg %p64
        %p573 = pneg %p61
        %p574 = scmp.lt.s32.totalorder %s36, 1
        %s575 = scalar_select %p574, %s36, 1
        %s576 = scalar_lea.vmem %s1, %s575
        %p577 = pneg %p90
        %p578 = pneg %p87
        %p579 = scmp.lt.s32.totalorder %s36, 1
        %s580 = scalar_select %p579, %s36, 1
        %s581 = scalar_lea.vmem %s2, %s580
        %p582 = pneg %p116
        %p583 = pneg %p113
        %p584 = scmp.lt.s32.totalorder %s36, 1
        %s585 = scalar_select %p584, %s36, 1
        %s586 = smul.addr %s585, 4
        %s587 = smul.addr %s586, 4
        %s588 = scalar_lea.vmem %s3, %s587
        %p589 = pneg %p142
        %p590 = pneg %p139
        %p591 = scmp.lt.s32.totalorder %s36, 1
        %s592 = scalar_select %p591, %s36, 1
        %s593 = smul.addr %s592, 4
        %s594 = smul.addr %s593, 4
        %s595 = scalar_lea.vmem %s4, %s594
        %p596 = pneg %p168
        %p597 = pneg %p165
        %s598 = sand.u32 %s31, 1
        %s599 = scalar_lea.sflag [#allocation8], %s598
        %s600 = sand.u32 %s181, 1
        %s601 = scalar_lea.vmem [#allocation7], %s600
        %p602 = pneg %p194
        %p603 = pneg %p191
        %s604 = sand.u32 %s31, 1
        %s605 = scalar_lea.sflag [#allocation8], %s604
        %s606 = sand.u32 %s207, 1
        %s607 = scalar_lea.vmem [#allocation9], %s606
        %p608 = pneg %p220
        %p609 = pneg %p217
        %s610 = sand.u32 %s31, 1
        %s611 = scalar_lea.sflag [#allocation11], %s610
        %s612 = sand.u32 %s233, 1
        %s613 = scalar_lea.vmem [#allocation10], %s612
        %p614 = pneg %p246
        %p615 = pneg %p243
        %p616 = scmp.lt.s32.totalorder %s36, 1
        %s617 = scalar_select %p616, %s36, 1
        %s618 = smul.addr %s617, 4
        %s619 = smul.addr %s618, 4
        %s620 = scalar_lea.vmem %s8, %s619
        %p621 = pneg %p272
        %p622 = pneg %p269
        %s623 = sand.u32 %s31, 1
        %s624 = scalar_lea.sflag [#allocation11], %s623
        %s625 = sand.u32 %s285, 1
        %s626 = scalar_lea.vmem [#allocation12], %s625
        %p627 = pneg %p298
        %p628 = pneg %p295
        %p629 = scmp.lt.s32.totalorder %s36, 1
        %s630 = scalar_select %p629, %s36, 1
        %s631 = smul.addr %s630, 8
        %s632 = smul.addr %s631, 4
        %s633 = scalar_lea.vmem %s10, %s632
        %p634 = pneg %p324
        %p635 = pneg %p321
        %p636 = scmp.lt.s32.totalorder %s36, 1
        %s637 = scalar_select %p636, %s36, 1
        %s638 = scalar_lea.vmem %s11, %s637
        %p639 = pneg %p350
        %p640 = pneg %p347
        %p641 = pneg %p376
        %p642 = pneg %p373
        %s643 = smul.u32 2, %s35
        %p644 = scmp.lt.s32.totalorder %s36, 1
        %s645 = scalar_select %p644, %s36, 1
        %s646 = scalar_lea.vmem %s1, %s645
        %p647 = scmp.lt.s32.totalorder %s36, 1
        %s648 = scalar_select %p647, %s36, 1
        %s649 = scalar_lea.vmem %s2, %s648
        %p650 = scmp.lt.s32.totalorder %s36, 1
        %s651 = scalar_select %p650, %s36, 1
        %s652 = smul.addr %s651, 4
        %s653 = smul.addr %s652, 4
        %s654 = scalar_lea.vmem %s3, %s653
        %p655 = scmp.lt.s32.totalorder %s36, 1
        %s656 = scalar_select %p655, %s36, 1
        %s657 = smul.addr %s656, 4
        %s658 = smul.addr %s657, 4
        %s659 = scalar_lea.vmem %s4, %s658
        %p660 = scmp.lt.s32.totalorder %s36, 1
        %s661 = scalar_select %p660, %s36, 1
        %s662 = smul.addr %s661, 4
        %s663 = smul.addr %s662, 4
        %s664 = scalar_lea.vmem %s8, %s663
        %p665 = scmp.lt.s32.totalorder %s36, 1
        %s666 = scalar_select %p665, %s36, 1
        %s667 = smul.addr %s666, 8
        %s668 = smul.addr %s667, 4
        %s669 = scalar_lea.vmem %s10, %s668
        %p670 = scmp.lt.s32.totalorder %s36, 1
        %s671 = scalar_select %p670, %s36, 1
        %s672 = scalar_lea.vmem %s11, %s671
        %s673 = smul.u32 2, %s35
        %p675 = scmp.eq.s32.totalorder %s36, 0
        // Predicated region
        $region89: #{tpu_custom_call.1} parent=67 // pred_check
          %p676 = pneg %p675
        $region90: #{tpu_custom_call.1} parent=67 // pred_check_branch
          %678 = sbr.rel (%p676) target = $region92
        $region91: #{tpu_custom_call.1} parent=67 // pred_region
          %v679 = vld [vmem:[#allocation4] sm:$0xff]
          %v680 = vld [vmem:[#allocation4 + $0x8] sm:$0xff]
          %vm681 = vcmask 261120
          %682 = vst.msk [vmem:[#allocation2] sm:$0xff] %vm681, %v679
          %683 = vst.msk [vmem:[#allocation2 + $0x8] sm:$0xff] %vm681, %v680
        $region92: #{tpu_custom_call.1} parent=67 // pred_fallthru
          _
        %v684 = vld [vmem:[#allocation2] sm:$0xff]
        %v685 = vld [vmem:[#allocation2 + $0x8] sm:$0xff]
        %v686 = vld [vmem:[%s646] sm:$0x1]
        %v687 = vld [vmem:[%s649] sm:$0x1]
        %vm688 = vcmask 261120
        %v689 = vsel %vm688, %v684, 0.0
        %690 = vadd.xlane.f32.xlu0 %v689
        %v691 = vpop.xlane.xlu0 %690
        %v692 = vsel %vm688, %v685, 0.0
        %693 = vadd.xlane.f32.xlu0 %v692
        %v694 = vpop.xlane.xlu0 %693
        %v695 = vrcp.pop 32.0
        %v696 = vmul.f32 %v691, %v695
        %v697 = vmul.f32 %v694, %v695
        %v698 = vsub.f32 %v684, %v696
        %v699 = vsub.f32 %v685, %v697
        %v700 = vmul.f32 %v698, %v698
        %v701 = vmul.f32 %v699, %v699
        %v702 = vsel %vm688, %v700, 0.0
        %703 = vadd.xlane.f32.xlu0 %v702
        %v704 = vpop.xlane.xlu0 %703
        %v705 = vsel %vm688, %v701, 0.0
        %706 = vadd.xlane.f32.xlu0 %v705
        %v707 = vpop.xlane.xlu0 %706
        %v708 = vmul.f32 %v704, %v695
        %v709 = vmul.f32 %v707, %v695
        %v710 = vadd.f32 %v708, 1e-05
        %v711 = vadd.f32 %v709, 1e-05
        %v712 = vrsqrt.pop %v710
        %v713 = vrsqrt.pop %v711
        %v714 = vmul.f32 %v698, %v712
        %v715 = vmul.f32 %v699, %v713
        %v717 = vlaneseq
        %v718 = vshrl.u32 %v717, 7
        %v719 = vsub.s32 0, %v718
        %v720 = vrot.slane %v686, %v719
        %v722 = vmul.f32 %v714, %v720
        %v723 = vmul.f32 %v715, %v720
        %v725 = vlaneseq
        %v726 = vshrl.u32 %v725, 7
        %v727 = vsub.s32 0, %v726
        %v728 = vrot.slane %v687, %v727
        %v730 = vadd.f32 %v722, %v728
        %v731 = vadd.f32 %v723, %v728
        %v732 = vpack.c.bf16 %v731, %v730
        %v733 = vld [vmem:[%s654] sm:$0xf]
        %v734 = vld [vmem:[%s654 + $0x4] sm:$0xf]
        %v735 = vld [vmem:[%s654 + $0x8] sm:$0xf]
        %v736 = vld [vmem:[%s654 + $0xc] sm:$0xf]
        %v741 = vunpack.c.l.b16 %v733
        %v742 = vunpack.c.l.b16 %v734
        %v743 = vunpack.c.l.b16 %v735
        %v744 = vunpack.c.l.b16 %v736
        %v745 = vpack.c.b16 %v742, %v741
        %v746 = vpack.c.b16 %v744, %v743
        %v750 = vsel %vm688, %v732, 0
        %752 = vmatprep.subr.bf16.mxu0 0
        %753 = vmatpush1.bf16.msra.mxu0 %v745
        %754 = vmatprep.subr.bf16.mxu0 0
        %755 = vmatpush1.bf16.msra.mxu0 %v746
        %756 = vmatprep.subr.bf16.mxu0 0
        %757 = vmatpush1.bf16.msra.mxu0 0
        %758 = vmatprep.subr.bf16.mxu0 0
        %759 = vmatpush1.bf16.msra.mxu0 0
        %760 = vmatprep.subr.bf16.mxu0 0
        %761 = vmatpush1.bf16.msra.mxu0 0
        %762 = vmatprep.subr.bf16.mxu0 0
        %763 = vmatpush1.bf16.msra.mxu0 0
        %764 = vmatprep.subr.bf16.mxu0 0
        %765 = vmatpush1.bf16.msra.mxu0 0
        %766 = vmatprep.subr.bf16.mxu0 0
        %767 = vmatpush1.bf16.msra.mxu0 0
        %768 = vmatprep.subr.bf16.mxu0 0
        %769 = vmatpush1.bf16.msra.mxu0 0
        %770 = vmatprep.subr.bf16.mxu0 0
        %771 = vmatpush1.bf16.msra.mxu0 0
        %772 = vmatprep.subr.bf16.mxu0 0
        %773 = vmatpush1.bf16.msra.mxu0 0
        %774 = vmatprep.subr.bf16.mxu0 0
        %775 = vmatpush1.bf16.msra.mxu0 0
        %776 = vmatprep.subr.bf16.mxu0 0
        %777 = vmatpush1.bf16.msra.mxu0 0
        %778 = vmatprep.subr.bf16.mxu0 0
        %779 = vmatpush1.bf16.msra.mxu0 0
        %780 = vmatprep.subr.bf16.mxu0 0
        %781 = vmatpush1.bf16.msra.mxu0 0
        %782 = vmatprep.subr.bf16.mxu0 0
        %783 = vmatpush1.bf16.msra.mxu0 0
        %784 = vmatprep.mubr.bf16.mxu0 0
        %785 = vmatmul.mubr.bf16.gmra.mrb[0].mxu0 %v750
        %v786 = vpop.f32.mrb[0].mxu0
        %v787 = vadd.f32 0.0, %v786
        %v788 = vpop.f32.mrb[0].mxu0
        %v789 = vpop.f32.mrb[0].mxu0
        %v790 = vadd.f32 0.0, %v789
        %v791 = vpop.f32.mrb[0].mxu0
        %792 = vdwg.mxu0
        %v793 = vpack.c.bf16 %v787, %v787
        %v794 = vpack.c.bf16 %v790, %v790
        %796 = vrot.lane.b32.xlu0 %v793, 96
        %v797 = vpop.permute.xlu0 %796
        %vm798 = vcmask 64512
        %v800 = vsel %vm798, %v793, 0
        %v803 = vsel %vm798, %v797, 0
        %805 = vmatprep.subr.bf16.mxu0 0
        %806 = vmatpush1.bf16.xpose.msra.mxu0 %v803
        %807 = vmatprep.subr.bf16.mxu0 0
        %808 = vmatpush1.bf16.xpose.msra.mxu0 0
        %809 = vmatprep.subr.bf16.mxu0 0
        %810 = vmatpush1.bf16.xpose.msra.mxu0 0
        %811 = vmatprep.subr.bf16.mxu0 0
        %812 = vmatpush1.bf16.xpose.msra.mxu0 0
        %813 = vmatprep.subr.bf16.mxu0 0
        %814 = vmatpush1.bf16.xpose.msra.mxu0 0
        %815 = vmatprep.subr.bf16.mxu0 0
        %816 = vmatpush1.bf16.xpose.msra.mxu0 0
        %817 = vmatprep.subr.bf16.mxu0 0
        %818 = vmatpush1.bf16.xpose.msra.mxu0 0
        %819 = vmatprep.subr.bf16.mxu0 0
        %820 = vmatpush1.bf16.xpose.msra.mxu0 0
        %821 = vmatprep.subr.bf16.mxu0 0
        %822 = vmatpush1.bf16.xpose.msra.mxu0 0
        %823 = vmatprep.subr.bf16.mxu0 0
        %824 = vmatpush1.bf16.xpose.msra.mxu0 0
        %825 = vmatprep.subr.bf16.mxu0 0
        %826 = vmatpush1.bf16.xpose.msra.mxu0 0
        %827 = vmatprep.subr.bf16.mxu0 0
        %828 = vmatpush1.bf16.xpose.msra.mxu0 0
        %829 = vmatprep.subr.bf16.mxu0 0
        %830 = vmatpush1.bf16.xpose.msra.mxu0 0
        %831 = vmatprep.subr.bf16.mxu0 0
        %832 = vmatpush1.bf16.xpose.msra.mxu0 0
        %833 = vmatprep.subr.bf16.mxu0 0
        %834 = vmatpush1.bf16.xpose.msra.mxu0 0
        %835 = vmatprep.subr.bf16.mxu0 0
        %836 = vmatpush1.bf16.xpose.msra.mxu0 0
        %837 = vmatprep.mubr.bf16.mxu0 0
        %838 = vmatmul.mubr.bf16.gmra.mrb[0].mxu0 %v800
        %v839 = vpop.f32.mrb[0].mxu0
        %v840 = vadd.f32 0.0, %v839
        %v841 = vpop.f32.mrb[0].mxu0
        %v842 = vpop.f32.mrb[0].mxu0
        %v843 = vpop.f32.mrb[0].mxu0
        %844 = vdwg.mxu0
        %846 = vrot.lane.b32.xlu0 %v794, 96
        %v847 = vpop.permute.xlu0 %846
        %v849 = vsel %vm798, %v794, 0
        %v852 = vsel %vm798, %v847, 0
        %854 = vmatprep.subr.bf16.mxu0 0
        %855 = vmatpush1.bf16.xpose.msra.mxu0 %v852
        %856 = vmatprep.subr.bf16.mxu0 0
        %857 = vmatpush1.bf16.xpose.msra.mxu0 0
        %858 = vmatprep.subr.bf16.mxu0 0
        %859 = vmatpush1.bf16.xpose.msra.mxu0 0
        %860 = vmatprep.subr.bf16.mxu0 0
        %861 = vmatpush1.bf16.xpose.msra.mxu0 0
        %862 = vmatprep.subr.bf16.mxu0 0
        %863 = vmatpush1.bf16.xpose.msra.mxu0 0
        %864 = vmatprep.subr.bf16.mxu0 0
        %865 = vmatpush1.bf16.xpose.msra.mxu0 0
        %866 = vmatprep.subr.bf16.mxu0 0
        %867 = vmatpush1.bf16.xpose.msra.mxu0 0
        %868 = vmatprep.subr.bf16.mxu0 0
        %869 = vmatpush1.bf16.xpose.msra.mxu0 0
        %870 = vmatprep.subr.bf16.mxu0 0
        %871 = vmatpush1.bf16.xpose.msra.mxu0 0
        %872 = vmatprep.subr.bf16.mxu0 0
        %873 = vmatpush1.bf16.xpose.msra.mxu0 0
        %874 = vmatprep.subr.bf16.mxu0 0
        %875 = vmatpush1.bf16.xpose.msra.mxu0 0
        %876 = vmatprep.subr.bf16.mxu0 0
        %877 = vmatpush1.bf16.xpose.msra.mxu0 0
        %878 = vmatprep.subr.bf16.mxu0 0
        %879 = vmatpush1.bf16.xpose.msra.mxu0 0
        %880 = vmatprep.subr.bf16.mxu0 0
        %881 = vmatpush1.bf16.xpose.msra.mxu0 0
        %882 = vmatprep.subr.bf16.mxu0 0
        %883 = vmatpush1.bf16.xpose.msra.mxu0 0
        %884 = vmatprep.subr.bf16.mxu0 0
        %885 = vmatpush1.bf16.xpose.msra.mxu0 0
        %886 = vmatprep.mubr.bf16.mxu0 0
        %887 = vmatmul.mubr.bf16.gmra.mrb[0].mxu0 %v849
        %v888 = vpop.f32.mrb[0].mxu0
        %v889 = vadd.f32 0.0, %v888
        %v890 = vpop.f32.mrb[0].mxu0
        %v891 = vpop.f32.mrb[0].mxu0
        %v892 = vpop.f32.mrb[0].mxu0
        %893 = vdwg.mxu0
        %v894 = vsel %vm798, %v840, -inf
        %895 = vmax.xlane.f32.xlu0 %v894
        %v896 = vpop.xlane.xlu0 %895
        %v897 = vsel %vm798, %v889, -inf
        %898 = vmax.xlane.f32.xlu0 %v897
        %v899 = vpop.xlane.xlu0 %898
        %v900 = vsub.f32 %v840, %v896
        %v901 = vsub.f32 %v889, %v899
        %v902 = vmul.f32 %v900, 1.442695
        %v903 = vpow.pop %v902
        %v904 = vmul.f32 %v901, 1.442695
        %v905 = vpow.pop %v904
        %v906 = vsel %vm798, %v903, 0.0
        %907 = vadd.xlane.f32.xlu0 %v906
        %v908 = vpop.xlane.xlu0 %907
        %v909 = vsel %vm798, %v905, 0.0
        %910 = vadd.xlane.f32.xlu0 %v909
        %v911 = vpop.xlane.xlu0 %910
        %v912 = vrcp.pop %v908
        %v913 = vrcp.pop %v911
        %v914 = vmul.f32 %v903, %v912
        %v915 = vmul.f32 %v905, %v913
        %v916 = vpack.c.bf16 %v914, %v914
        %v917 = vpack.c.bf16 %v915, %v915
        %918 = vrot.lane.b32.xlu0 %v793, 64
        %v919 = vpop.permute.xlu0 %918
        %v921 = vsel %vm798, %v916, 0
        %vm923 = vcmask 1043456
        %v925 = vsel %vm923, %v919, 0
        %927 = vmatprep.subr.bf16.mxu0 0
        %928 = vmatpush1.bf16.msra.mxu0 %v925
        %929 = vmatprep.subr.bf16.mxu0 0
        %930 = vmatpush1.bf16.msra.mxu0 0
        %931 = vmatprep.subr.bf16.mxu0 0
        %932 = vmatpush1.bf16.msra.mxu0 0
        %933 = vmatprep.subr.bf16.mxu0 0
        %934 = vmatpush1.bf16.msra.mxu0 0
        %935 = vmatprep.subr.bf16.mxu0 0
        %936 = vmatpush1.bf16.msra.mxu0 0
        %937 = vmatprep.subr.bf16.mxu0 0
        %938 = vmatpush1.bf16.msra.mxu0 0
        %939 = vmatprep.subr.bf16.mxu0 0
        %940 = vmatpush1.bf16.msra.mxu0 0
        %941 = vmatprep.subr.bf16.mxu0 0
        %942 = vmatpush1.bf16.msra.mxu0 0
        %943 = vmatprep.subr.bf16.mxu0 0
        %944 = vmatpush1.bf16.msra.mxu0 0
        %945 = vmatprep.subr.bf16.mxu0 0
        %946 = vmatpush1.bf16.msra.mxu0 0
        %947 = vmatprep.subr.bf16.mxu0 0
        %948 = vmatpush1.bf16.msra.mxu0 0
        %949 = vmatprep.subr.bf16.mxu0 0
        %950 = vmatpush1.bf16.msra.mxu0 0
        %951 = vmatprep.subr.bf16.mxu0 0
        %952 = vmatpush1.bf16.msra.mxu0 0
        %953 = vmatprep.subr.bf16.mxu0 0
        %954 = vmatpush1.bf16.msra.mxu0 0
        %955 = vmatprep.subr.bf16.mxu0 0
        %956 = vmatpush1.bf16.msra.mxu0 0
        %957 = vmatprep.subr.bf16.mxu0 0
        %958 = vmatpush1.bf16.msra.mxu0 0
        %959 = vmatprep.mubr.bf16.mxu0 0
        %960 = vmatmul.mubr.bf16.gmra.mrb[0].mxu0 %v921
        %v961 = vpop.f32.mrb[0].mxu0
        %v962 = vadd.f32 0.0, %v961
        %v963 = vpop.f32.mrb[0].mxu0
        %v964 = vpop.f32.mrb[0].mxu0
        %v965 = vpop.f32.mrb[0].mxu0
        %966 = vdwg.mxu0
        %967 = vrot.lane.b32.xlu0 %v794, 64
        %v968 = vpop.permute.xlu0 %967
        %v970 = vsel %vm798, %v917, 0
        %v973 = vsel %vm923, %v968, 0
        %975 = vmatprep.subr.bf16.mxu0 0
        %976 = vmatpush1.bf16.msra.mxu0 %v973
        %977 = vmatprep.subr.bf16.mxu0 0
        %978 = vmatpush1.bf16.msra.mxu0 0
        %979 = vmatprep.subr.bf16.mxu0 0
        %980 = vmatpush1.bf16.msra.mxu0 0
        %981 = vmatprep.subr.bf16.mxu0 0
        %982 = vmatpush1.bf16.msra.mxu0 0
        %983 = vmatprep.subr.bf16.mxu0 0
        %984 = vmatpush1.bf16.msra.mxu0 0
        %985 = vmatprep.subr.bf16.mxu0 0
        %986 = vmatpush1.bf16.msra.mxu0 0
        %987 = vmatprep.subr.bf16.mxu0 0
        %988 = vmatpush1.bf16.msra.mxu0 0
        %989 = vmatprep.subr.bf16.mxu0 0
        %990 = vmatpush1.bf16.msra.mxu0 0
        %991 = vmatprep.subr.bf16.mxu0 0
        %992 = vmatpush1.bf16.msra.mxu0 0
        %993 = vmatprep.subr.bf16.mxu0 0
        %994 = vmatpush1.bf16.msra.mxu0 0
        %995 = vmatprep.subr.bf16.mxu0 0
        %996 = vmatpush1.bf16.msra.mxu0 0
        %997 = vmatprep.subr.bf16.mxu0 0
        %998 = vmatpush1.bf16.msra.mxu0 0
        %999 = vmatprep.subr.bf16.mxu0 0
        %1000 = vmatpush1.bf16.msra.mxu0 0
        %1001 = vmatprep.subr.bf16.mxu0 0
        %1002 = vmatpush1.bf16.msra.mxu0 0
        %1003 = vmatprep.subr.bf16.mxu0 0
        %1004 = vmatpush1.bf16.msra.mxu0 0
        %1005 = vmatprep.subr.bf16.mxu0 0
        %1006 = vmatpush1.bf16.msra.mxu0 0
        %1007 = vmatprep.mubr.bf16.mxu0 0
        %1008 = vmatmul.mubr.bf16.gmra.mrb[0].mxu0 %v970
        %v1009 = vpop.f32.mrb[0].mxu0
        %v1010 = vadd.f32 0.0, %v1009
        %v1011 = vpop.f32.mrb[0].mxu0
        %v1012 = vpop.f32.mrb[0].mxu0
        %v1013 = vpop.f32.mrb[0].mxu0
        %1014 = vdwg.mxu0
        %1015 = vst.msk [vmem:[#allocation3] sm:$0xff] %vm798, %v962
        %1016 = vst.msk [vmem:[#allocation3 + $0x8] sm:$0xff] %vm798, %v1010
        %1017 = vrot.lane.b32.xlu0 %v793, 120
        %v1018 = vpop.permute.xlu0 %1017
        %1019 = vrot.lane.b32.xlu0 %v793, 88
        %v1020 = vpop.permute.xlu0 %1019
        %v1022 = vsel %vm798, %v1018, 0
        %v1025 = vsel %vm798, %v1020, 0
        %1027 = vmatprep.subr.bf16.mxu0 0
        %1028 = vmatpush1.bf16.xpose.msra.mxu0 %v1025
        %1029 = vmatprep.subr.bf16.mxu0 0
        %1030 = vmatpush1.bf16.xpose.msra.mxu0 0
        %1031 = vmatprep.subr.bf16.mxu0 0
        %1032 = vmatpush1.bf16.xpose.msra.mxu0 0
        %1033 = vmatprep.subr.bf16.mxu0 0
        %1034 = vmatpush1.bf16.xpose.msra.mxu0 0
        %1035 = vmatprep.subr.bf16.mxu0 0
        %1036 = vmatpush1.bf16.xpose.msra.mxu0 0
        %1037 = vmatprep.subr.bf16.mxu0 0
        %1038 = vmatpush1.bf16.xpose.msra.mxu0 0
        %1039 = vmatprep.subr.bf16.mxu0 0
        %1040 = vmatpush1.bf16.xpose.msra.mxu0 0
        %1041 = vmatprep.subr.bf16.mxu0 0
        %1042 = vmatpush1.bf16.xpose.msra.mxu0 0
        %1043 = vmatprep.subr.bf16.mxu0 0
        %1044 = vmatpush1.bf16.xpose.msra.mxu0 0
        %1045 = vmatprep.subr.bf16.mxu0 0
        %1046 = vmatpush1.bf16.xpose.msra.mxu0 0
        %1047 = vmatprep.subr.bf16.mxu0 0
        %1048 = vmatpush1.bf16.xpose.msra.mxu0 0
        %1049 = vmatprep.subr.bf16.mxu0 0
        %1050 = vmatpush1.bf16.xpose.msra.mxu0 0
        %1051 = vmatprep.subr.bf16.mxu0 0
        %1052 = vmatpush1.bf16.xpose.msra.mxu0 0
        %1053 = vmatprep.subr.bf16.mxu0 0
        %1054 = vmatpush1.bf16.xpose.msra.mxu0 0
        %1055 = vmatprep.subr.bf16.mxu0 0
        %1056 = vmatpush1.bf16.xpose.msra.mxu0 0
        %1057 = vmatprep.subr.bf16.mxu0 0
        %1058 = vmatpush1.bf16.xpose.msra.mxu0 0
        %1059 = vmatprep.mubr.bf16.mxu0 0
        %1060 = vmatmul.mubr.bf16.gmra.mrb[0].mxu0 %v1022
        %v1061 = vpop.f32.mrb[0].mxu0
        %v1062 = vadd.f32 0.0, %v1061
        %v1063 = vpop.f32.mrb[0].mxu0
        %v1064 = vpop.f32.mrb[0].mxu0
        %v1065 = vpop.f32.mrb[0].mxu0
        %1066 = vdwg.mxu0
        %1067 = vrot.lane.b32.xlu0 %v794, 120
        %v1068 = vpop.permute.xlu0 %1067
        %1069 = vrot.lane.b32.xlu0 %v794, 88
        %v1070 = vpop.permute.xlu0 %1069
        %v1072 = vsel %vm798, %v1068, 0
        %v1075 = vsel %vm798, %v1070, 0
        %1077 = vmatprep.subr.bf16.mxu0 0
        %1078 = vmatpush1.bf16.xpose.msra.mxu0 %v1075
        %1079 = vmatprep.subr.bf16.mxu0 0
        %1080 = vmatpush1.bf16.xpose.msra.mxu0 0
        %1081 = vmatprep.subr.bf16.mxu0 0
        %1082 = vmatpush1.bf16.xpose.msra.mxu0 0
        %1083 = vmatprep.subr.bf16.mxu0 0
        %1084 = vmatpush1.bf16.xpose.msra.mxu0 0
        %1085 = vmatprep.subr.bf16.mxu0 0
        %1086 = vmatpush1.bf16.xpose.msra.mxu0 0
        %1087 = vmatprep.subr.bf16.mxu0 0
        %1088 = vmatpush1.bf16.xpose.msra.mxu0 0
        %1089 = vmatprep.subr.bf16.mxu0 0
        %1090 = vmatpush1.bf16.xpose.msra.mxu0 0
        %1091 = vmatprep.subr.bf16.mxu0 0
        %1092 = vmatpush1.bf16.xpose.msra.mxu0 0
        %1093 = vmatprep.subr.bf16.mxu0 0
        %1094 = vmatpush1.bf16.xpose.msra.mxu0 0
        %1095 = vmatprep.subr.bf16.mxu0 0
        %1096 = vmatpush1.bf16.xpose.msra.mxu0 0
        %1097 = vmatprep.subr.bf16.mxu0 0
        %1098 = vmatpush1.bf16.xpose.msra.mxu0 0
        %1099 = vmatprep.subr.bf16.mxu0 0
        %1100 = vmatpush1.bf16.xpose.msra.mxu0 0
        %1101 = vmatprep.subr.bf16.mxu0 0
        %1102 = vmatpush1.bf16.xpose.msra.mxu0 0
        %1103 = vmatprep.subr.bf16.mxu0 0
        %1104 = vmatpush1.bf16.xpose.msra.mxu0 0
        %1105 = vmatprep.subr.bf16.mxu0 0
        %1106 = vmatpush1.bf16.xpose.msra.mxu0 0
        %1107 = vmatprep.subr.bf16.mxu0 0
        %1108 = vmatpush1.bf16.xpose.msra.mxu0 0
        %1109 = vmatprep.mubr.bf16.mxu0 0
        %1110 = vmatmul.mubr.bf16.gmra.mrb[0].mxu0 %v1072
        %v1111 = vpop.f32.mrb[0].mxu0
        %v1112 = vadd.f32 0.0, %v1111
        %v1113 = vpop.f32.mrb[0].mxu0
        %v1114 = vpop.f32.mrb[0].mxu0
        %v1115 = vpop.f32.mrb[0].mxu0
        %1116 = vdwg.mxu0
        %v1117 = vsel %vm798, %v1062, -inf
        %1118 = vmax.xlane.f32.xlu0 %v1117
        %v1119 = vpop.xlane.xlu0 %1118
        %v1120 = vsel %vm798, %v1112, -inf
        %1121 = vmax.xlane.f32.xlu0 %v1120
        %v1122 = vpop.xlane.xlu0 %1121
        %v1123 = vsub.f32 %v1062, %v1119
        %v1124 = vsub.f32 %v1112, %v1122
        %v1125 = vmul.f32 %v1123, 1.442695
        %v1126 = vpow.pop %v1125
        %v1127 = vmul.f32 %v1124, 1.442695
        %v1128 = vpow.pop %v1127
        %v1129 = vsel %vm798, %v1126, 0.0
        %1130 = vadd.xlane.f32.xlu0 %v1129
        %v1131 = vpop.xlane.xlu0 %1130
        %v1132 = vsel %vm798, %v1128, 0.0
        %1133 = vadd.xlane.f32.xlu0 %v1132
        %v1134 = vpop.xlane.xlu0 %1133
        %v1135 = vrcp.pop %v1131
        %v1136 = vrcp.pop %v1134
        %v1137 = vmul.f32 %v1126, %v1135
        %v1138 = vmul.f32 %v1128, %v1136
        %v1139 = vpack.c.bf16 %v1137, %v1137
        %v1140 = vpack.c.bf16 %v1138, %v1138
        %1141 = vrot.lane.b32.xlu0 %v793, 56
        %v1142 = vpop.permute.xlu0 %1141
        %v1144 = vsel %vm798, %v1139, 0
        %v1147 = vsel %vm923, %v1142, 0
        %1149 = vmatprep.subr.bf16.mxu0 0
        %1150 = vmatpush1.bf16.msra.mxu0 %v1147
        %1151 = vmatprep.subr.bf16.mxu0 0
        %1152 = vmatpush1.bf16.msra.mxu0 0
        %1153 = vmatprep.subr.bf16.mxu0 0
        %1154 = vmatpush1.bf16.msra.mxu0 0
        %1155 = vmatprep.subr.bf16.mxu0 0
        %1156 = vmatpush1.bf16.msra.mxu0 0
        %1157 = vmatprep.subr.bf16.mxu0 0
        %1158 = vmatpush1.bf16.msra.mxu0 0
        %1159 = vmatprep.subr.bf16.mxu0 0
        %1160 = vmatpush1.bf16.msra.mxu0 0
        %1161 = vmatprep.subr.bf16.mxu0 0
        %1162 = vmatpush1.bf16.msra.mxu0 0
        %1163 = vmatprep.subr.bf16.mxu0 0
        %1164 = vmatpush1.bf16.msra.mxu0 0
        %1165 = vmatprep.subr.bf16.mxu0 0
        %1166 = vmatpush1.bf16.msra.mxu0 0
        %1167 = vmatprep.subr.bf16.mxu0 0
        %1168 = vmatpush1.bf16.msra.mxu0 0
        %1169 = vmatprep.subr.bf16.mxu0 0
        %1170 = vmatpush1.bf16.msra.mxu0 0
        %1171 = vmatprep.subr.bf16.mxu0 0
        %1172 = vmatpush1.bf16.msra.mxu0 0
        %1173 = vmatprep.subr.bf16.mxu0 0
        %1174 = vmatpush1.bf16.msra.mxu0 0
        %1175 = vmatprep.subr.bf16.mxu0 0
        %1176 = vmatpush1.bf16.msra.mxu0 0
        %1177 = vmatprep.subr.bf16.mxu0 0
        %1178 = vmatpush1.bf16.msra.mxu0 0
        %1179 = vmatprep.subr.bf16.mxu0 0
        %1180 = vmatpush1.bf16.msra.mxu0 0
        %1181 = vmatprep.mubr.bf16.mxu0 0
        %1182 = vmatmul.mubr.bf16.gmra.mrb[0].mxu0 %v1144
        %v1183 = vpop.f32.mrb[0].mxu0
        %v1184 = vadd.f32 0.0, %v1183
        %v1185 = vpop.f32.mrb[0].mxu0
        %v1186 = vpop.f32.mrb[0].mxu0
        %v1187 = vpop.f32.mrb[0].mxu0
        %1188 = vdwg.mxu0
        %1189 = vrot.lane.b32.xlu0 %v794, 56
        %v1190 = vpop.permute.xlu0 %1189
        %v1192 = vsel %vm798, %v1140, 0
        %v1195 = vsel %vm923, %v1190, 0
        %1197 = vmatprep.subr.bf16.mxu0 0
        %1198 = vmatpush1.bf16.msra.mxu0 %v1195
        %1199 = vmatprep.subr.bf16.mxu0 0
        %1200 = vmatpush1.bf16.msra.mxu0 0
        %1201 = vmatprep.subr.bf16.mxu0 0
        %1202 = vmatpush1.bf16.msra.mxu0 0
        %1203 = vmatprep.subr.bf16.mxu0 0
        %1204 = vmatpush1.bf16.msra.mxu0 0
        %1205 = vmatprep.subr.bf16.mxu0 0
        %1206 = vmatpush1.bf16.msra.mxu0 0
        %1207 = vmatprep.subr.bf16.mxu0 0
        %1208 = vmatpush1.bf16.msra.mxu0 0
        %1209 = vmatprep.subr.bf16.mxu0 0
        %1210 = vmatpush1.bf16.msra.mxu0 0
        %1211 = vmatprep.subr.bf16.mxu0 0
        %1212 = vmatpush1.bf16.msra.mxu0 0
        %1213 = vmatprep.subr.bf16.mxu0 0
        %1214 = vmatpush1.bf16.msra.mxu0 0
        %1215 = vmatprep.subr.bf16.mxu0 0
        %1216 = vmatpush1.bf16.msra.mxu0 0
        %1217 = vmatprep.subr.bf16.mxu0 0
        %1218 = vmatpush1.bf16.msra.mxu0 0
        %1219 = vmatprep.subr.bf16.mxu0 0
        %1220 = vmatpush1.bf16.msra.mxu0 0
        %1221 = vmatprep.subr.bf16.mxu0 0
        %1222 = vmatpush1.bf16.msra.mxu0 0
        %1223 = vmatprep.subr.bf16.mxu0 0
        %1224 = vmatpush1.bf16.msra.mxu0 0
        %1225 = vmatprep.subr.bf16.mxu0 0
        %1226 = vmatpush1.bf16.msra.mxu0 0
        %1227 = vmatprep.subr.bf16.mxu0 0
        %1228 = vmatpush1.bf16.msra.mxu0 0
        %1229 = vmatprep.mubr.bf16.mxu0 0
        %1230 = vmatmul.mubr.bf16.gmra.mrb[0].mxu0 %v1192
        %v1231 = vpop.f32.mrb[0].mxu0
        %v1232 = vadd.f32 0.0, %v1231
        %v1233 = vpop.f32.mrb[0].mxu0
        %v1234 = vpop.f32.mrb[0].mxu0
        %v1235 = vpop.f32.mrb[0].mxu0
        %1236 = vdwg.mxu0
        %1239 = vrot.lane.b32.xlu0 %v1184, 8
        %v1240 = vpop.permute.xlu0 %1239
        %1241 = vrot.lane.b32.xlu0 %v1232, 8
        %v1242 = vpop.permute.xlu0 %1241
        %vm1245 = vcmask 130112
        %1246 = vst.msk [vmem:[#allocation3] sm:$0xff] %vm1245, %v1240
        %1247 = vst.msk [vmem:[#allocation3 + $0x8] sm:$0xff] %vm1245, %v1242
        %1248 = vrot.lane.b32.xlu0 %v793, 112
        %v1249 = vpop.permute.xlu0 %1248
        %1250 = vrot.lane.b32.xlu0 %v793, 80
        %v1251 = vpop.permute.xlu0 %1250
        %v1253 = vsel %vm798, %v1249, 0
        %v1256 = vsel %vm798, %v1251, 0
        %1258 = vmatprep.subr.bf16.mxu0 0
        %1259 = vmatpush1.bf16.xpose.msra.mxu0 %v1256
        %1260 = vmatprep.subr.bf16.mxu0 0
        %1261 = vmatpush1.bf16.xpose.msra.mxu0 0
        %1262 = vmatprep.subr.bf16.mxu0 0
        %1263 = vmatpush1.bf16.xpose.msra.mxu0 0
        %1264 = vmatprep.subr.bf16.mxu0 0
        %1265 = vmatpush1.bf16.xpose.msra.mxu0 0
        %1266 = vmatprep.subr.bf16.mxu0 0
        %1267 = vmatpush1.bf16.xpose.msra.mxu0 0
        %1268 = vmatprep.subr.bf16.mxu0 0
        %1269 = vmatpush1.bf16.xpose.msra.mxu0 0
        %1270 = vmatprep.subr.bf16.mxu0 0
        %1271 = vmatpush1.bf16.xpose.msra.mxu0 0
        %1272 = vmatprep.subr.bf16.mxu0 0
        %1273 = vmatpush1.bf16.xpose.msra.mxu0 0
        %1274 = vmatprep.subr.bf16.mxu0 0
        %1275 = vmatpush1.bf16.xpose.msra.mxu0 0
        %1276 = vmatprep.subr.bf16.mxu0 0
        %1277 = vmatpush1.bf16.xpose.msra.mxu0 0
        %1278 = vmatprep.subr.bf16.mxu0 0
        %1279 = vmatpush1.bf16.xpose.msra.mxu0 0
        %1280 = vmatprep.subr.bf16.mxu0 0
        %1281 = vmatpush1.bf16.xpose.msra.mxu0 0
        %1282 = vmatprep.subr.bf16.mxu0 0
        %1283 = vmatpush1.bf16.xpose.msra.mxu0 0
        %1284 = vmatprep.subr.bf16.mxu0 0
        %1285 = vmatpush1.bf16.xpose.msra.mxu0 0
        %1286 = vmatprep.subr.bf16.mxu0 0
        %1287 = vmatpush1.bf16.xpose.msra.mxu0 0
        %1288 = vmatprep.subr.bf16.mxu0 0
        %1289 = vmatpush1.bf16.xpose.msra.mxu0 0
        %1290 = vmatprep.mubr.bf16.mxu0 0
        %1291 = vmatmul.mubr.bf16.gmra.mrb[0].mxu0 %v1253
        %v1292 = vpop.f32.mrb[0].mxu0
        %v1293 = vadd.f32 0.0, %v1292
        %v1294 = vpop.f32.mrb[0].mxu0
        %v1295 = vpop.f32.mrb[0].mxu0
        %v1296 = vpop.f32.mrb[0].mxu0
        %1297 = vdwg.mxu0
        %1298 = vrot.lane.b32.xlu0 %v794, 112
        %v1299 = vpop.permute.xlu0 %1298
        %1300 = vrot.lane.b32.xlu0 %v794, 80
        %v1301 = vpop.permute.xlu0 %1300
        %v1303 = vsel %vm798, %v1299, 0
        %v1306 = vsel %vm798, %v1301, 0
        %1308 = vmatprep.subr.bf16.mxu0 0
        %1309 = vmatpush1.bf16.xpose.msra.mxu0 %v1306
        %1310 = vmatprep.subr.bf16.mxu0 0
        %1311 = vmatpush1.bf16.xpose.msra.mxu0 0
        %1312 = vmatprep.subr.bf16.mxu0 0
        %1313 = vmatpush1.bf16.xpose.msra.mxu0 0
        %1314 = vmatprep.subr.bf16.mxu0 0
        %1315 = vmatpush1.bf16.xpose.msra.mxu0 0
        %1316 = vmatprep.subr.bf16.mxu0 0
        %1317 = vmatpush1.bf16.xpose.msra.mxu0 0
        %1318 = vmatprep.subr.bf16.mxu0 0
        %1319 = vmatpush1.bf16.xpose.msra.mxu0 0
        %1320 = vmatprep.subr.bf16.mxu0 0
        %1321 = vmatpush1.bf16.xpose.msra.mxu0 0
        %1322 = vmatprep.subr.bf16.mxu0 0
        %1323 = vmatpush1.bf16.xpose.msra.mxu0 0
        %1324 = vmatprep.subr.bf16.mxu0 0
        %1325 = vmatpush1.bf16.xpose.msra.mxu0 0
        %1326 = vmatprep.subr.bf16.mxu0 0
        %1327 = vmatpush1.bf16.xpose.msra.mxu0 0
        %1328 = vmatprep.subr.bf16.mxu0 0
        %1329 = vmatpush1.bf16.xpose.msra.mxu0 0
        %1330 = vmatprep.subr.bf16.mxu0 0
        %1331 = vmatpush1.bf16.xpose.msra.mxu0 0
        %1332 = vmatprep.subr.bf16.mxu0 0
        %1333 = vmatpush1.bf16.xpose.msra.mxu0 0
        %1334 = vmatprep.subr.bf16.mxu0 0
        %1335 = vmatpush1.bf16.xpose.msra.mxu0 0
        %1336 = vmatprep.subr.bf16.mxu0 0
        %1337 = vmatpush1.bf16.xpose.msra.mxu0 0
        %1338 = vmatprep.subr.bf16.mxu0 0
        %1339 = vmatpush1.bf16.xpose.msra.mxu0 0
        %1340 = vmatprep.mubr.bf16.mxu0 0
        %1341 = vmatmul.mubr.bf16.gmra.mrb[0].mxu0 %v1303
        %v1342 = vpop.f32.mrb[0].mxu0
        %v1343 = vadd.f32 0.0, %v1342
        %v1344 = vpop.f32.mrb[0].mxu0
        %v1345 = vpop.f32.mrb[0].mxu0
        %v1346 = vpop.f32.mrb[0].mxu0
        %1347 = vdwg.mxu0
        %v1348 = vsel %vm798, %v1293, -inf
        %1349 = vmax.xlane.f32.xlu0 %v1348
        %v1350 = vpop.xlane.xlu0 %1349
        %v1351 = vsel %vm798, %v1343, -inf
        %1352 = vmax.xlane.f32.xlu0 %v1351
        %v1353 = vpop.xlane.xlu0 %1352
        %v1354 = vsub.f32 %v1293, %v1350
        %v1355 = vsub.f32 %v1343, %v1353
        %v1356 = vmul.f32 %v1354, 1.442695
        %v1357 = vpow.pop %v1356
        %v1358 = vmul.f32 %v1355, 1.442695
        %v1359 = vpow.pop %v1358
        %v1360 = vsel %vm798, %v1357, 0.0
        %1361 = vadd.xlane.f32.xlu0 %v1360
        %v1362 = vpop.xlane.xlu0 %1361
        %v1363 = vsel %vm798, %v1359, 0.0
        %1364 = vadd.xlane.f32.xlu0 %v1363
        %v1365 = vpop.xlane.xlu0 %1364
        %v1366 = vrcp.pop %v1362
        %v1367 = vrcp.pop %v1365
        %v1368 = vmul.f32 %v1357, %v1366
        %v1369 = vmul.f32 %v1359, %v1367
        %v1370 = vpack.c.bf16 %v1368, %v1368
        %v1371 = vpack.c.bf16 %v1369, %v1369
        %1372 = vrot.lane.b32.xlu0 %v793, 48
        %v1373 = vpop.permute.xlu0 %1372
        %v1375 = vsel %vm798, %v1370, 0
        %v1378 = vsel %vm923, %v1373, 0
        %1380 = vmatprep.subr.bf16.mxu0 0
        %1381 = vmatpush1.bf16.msra.mxu0 %v1378
        %1382 = vmatprep.subr.bf16.mxu0 0
        %1383 = vmatpush1.bf16.msra.mxu0 0
        %1384 = vmatprep.subr.bf16.mxu0 0
        %1385 = vmatpush1.bf16.msra.mxu0 0
        %1386 = vmatprep.subr.bf16.mxu0 0
        %1387 = vmatpush1.bf16.msra.mxu0 0
        %1388 = vmatprep.subr.bf16.mxu0 0
        %1389 = vmatpush1.bf16.msra.mxu0 0
        %1390 = vmatprep.subr.bf16.mxu0 0
        %1391 = vmatpush1.bf16.msra.mxu0 0
        %1392 = vmatprep.subr.bf16.mxu0 0
        %1393 = vmatpush1.bf16.msra.mxu0 0
        %1394 = vmatprep.subr.bf16.mxu0 0
        %1395 = vmatpush1.bf16.msra.mxu0 0
        %1396 = vmatprep.subr.bf16.mxu0 0
        %1397 = vmatpush1.bf16.msra.mxu0 0
        %1398 = vmatprep.subr.bf16.mxu0 0
        %1399 = vmatpush1.bf16.msra.mxu0 0
        %1400 = vmatprep.subr.bf16.mxu0 0
        %1401 = vmatpush1.bf16.msra.mxu0 0
        %1402 = vmatprep.subr.bf16.mxu0 0
        %1403 = vmatpush1.bf16.msra.mxu0 0
        %1404 = vmatprep.subr.bf16.mxu0 0
        %1405 = vmatpush1.bf16.msra.mxu0 0
        %1406 = vmatprep.subr.bf16.mxu0 0
        %1407 = vmatpush1.bf16.msra.mxu0 0
        %1408 = vmatprep.subr.bf16.mxu0 0
        %1409 = vmatpush1.bf16.msra.mxu0 0
        %1410 = vmatprep.subr.bf16.mxu0 0
        %1411 = vmatpush1.bf16.msra.mxu0 0
        %1412 = vmatprep.mubr.bf16.mxu0 0
        %1413 = vmatmul.mubr.bf16.gmra.mrb[0].mxu0 %v1375
        %v1414 = vpop.f32.mrb[0].mxu0
        %v1415 = vadd.f32 0.0, %v1414
        %v1416 = vpop.f32.mrb[0].mxu0
        %v1417 = vpop.f32.mrb[0].mxu0
        %v1418 = vpop.f32.mrb[0].mxu0
        %1419 = vdwg.mxu0
        %1420 = vrot.lane.b32.xlu0 %v794, 48
        %v1421 = vpop.permute.xlu0 %1420
        %v1423 = vsel %vm798, %v1371, 0
        %v1426 = vsel %vm923, %v1421, 0
        %1428 = vmatprep.subr.bf16.mxu0 0
        %1429 = vmatpush1.bf16.msra.mxu0 %v1426
        %1430 = vmatprep.subr.bf16.mxu0 0
        %1431 = vmatpush1.bf16.msra.mxu0 0
        %1432 = vmatprep.subr.bf16.mxu0 0
        %1433 = vmatpush1.bf16.msra.mxu0 0
        %1434 = vmatprep.subr.bf16.mxu0 0
        %1435 = vmatpush1.bf16.msra.mxu0 0
        %1436 = vmatprep.subr.bf16.mxu0 0
        %1437 = vmatpush1.bf16.msra.mxu0 0
        %1438 = vmatprep.subr.bf16.mxu0 0
        %1439 = vmatpush1.bf16.msra.mxu0 0
        %1440 = vmatprep.subr.bf16.mxu0 0
        %1441 = vmatpush1.bf16.msra.mxu0 0
        %1442 = vmatprep.subr.bf16.mxu0 0
        %1443 = vmatpush1.bf16.msra.mxu0 0
        %1444 = vmatprep.subr.bf16.mxu0 0
        %1445 = vmatpush1.bf16.msra.mxu0 0
        %1446 = vmatprep.subr.bf16.mxu0 0
        %1447 = vmatpush1.bf16.msra.mxu0 0
        %1448 = vmatprep.subr.bf16.mxu0 0
        %1449 = vmatpush1.bf16.msra.mxu0 0
        %1450 = vmatprep.subr.bf16.mxu0 0
        %1451 = vmatpush1.bf16.msra.mxu0 0
        %1452 = vmatprep.subr.bf16.mxu0 0
        %1453 = vmatpush1.bf16.msra.mxu0 0
        %1454 = vmatprep.subr.bf16.mxu0 0
        %1455 = vmatpush1.bf16.msra.mxu0 0
        %1456 = vmatprep.subr.bf16.mxu0 0
        %1457 = vmatpush1.bf16.msra.mxu0 0
        %1458 = vmatprep.subr.bf16.mxu0 0
        %1459 = vmatpush1.bf16.msra.mxu0 0
        %1460 = vmatprep.mubr.bf16.mxu0 0
        %1461 = vmatmul.mubr.bf16.gmra.mrb[0].mxu0 %v1423
        %v1462 = vpop.f32.mrb[0].mxu0
        %v1463 = vadd.f32 0.0, %v1462
        %v1464 = vpop.f32.mrb[0].mxu0
        %v1465 = vpop.f32.mrb[0].mxu0
        %v1466 = vpop.f32.mrb[0].mxu0
        %1467 = vdwg.mxu0
        %1470 = vrot.lane.b32.xlu0 %v1415, 16
        %v1471 = vpop.permute.xlu0 %1470
        %1472 = vrot.lane.b32.xlu0 %v1463, 16
        %v1473 = vpop.permute.xlu0 %1472
        %vm1476 = vcmask 195712
        %1477 = vst.msk [vmem:[#allocation3] sm:$0xff] %vm1476, %v1471
        %1478 = vst.msk [vmem:[#allocation3 + $0x8] sm:$0xff] %vm1476, %v1473
        %1479 = vrot.lane.b32.xlu0 %v793, 104
        %v1480 = vpop.permute.xlu0 %1479
        %1481 = vrot.lane.b32.xlu0 %v793, 72
        %v1482 = vpop.permute.xlu0 %1481
        %v1484 = vsel %vm798, %v1480, 0
        %v1487 = vsel %vm798, %v1482, 0
        %1489 = vmatprep.subr.bf16.mxu0 0
        %1490 = vmatpush1.bf16.xpose.msra.mxu0 %v1487
        %1491 = vmatprep.subr.bf16.mxu0 0
        %1492 = vmatpush1.bf16.xpose.msra.mxu0 0
        %1493 = vmatprep.subr.bf16.mxu0 0
        %1494 = vmatpush1.bf16.xpose.msra.mxu0 0
        %1495 = vmatprep.subr.bf16.mxu0 0
        %1496 = vmatpush1.bf16.xpose.msra.mxu0 0
        %1497 = vmatprep.subr.bf16.mxu0 0
        %1498 = vmatpush1.bf16.xpose.msra.mxu0 0
        %1499 = vmatprep.subr.bf16.mxu0 0
        %1500 = vmatpush1.bf16.xpose.msra.mxu0 0
        %1501 = vmatprep.subr.bf16.mxu0 0
        %1502 = vmatpush1.bf16.xpose.msra.mxu0 0
        %1503 = vmatprep.subr.bf16.mxu0 0
        %1504 = vmatpush1.bf16.xpose.msra.mxu0 0
        %1505 = vmatprep.subr.bf16.mxu0 0
        %1506 = vmatpush1.bf16.xpose.msra.mxu0 0
        %1507 = vmatprep.subr.bf16.mxu0 0
        %1508 = vmatpush1.bf16.xpose.msra.mxu0 0
        %1509 = vmatprep.subr.bf16.mxu0 0
        %1510 = vmatpush1.bf16.xpose.msra.mxu0 0
        %1511 = vmatprep.subr.bf16.mxu0 0
        %1512 = vmatpush1.bf16.xpose.msra.mxu0 0
        %1513 = vmatprep.subr.bf16.mxu0 0
        %1514 = vmatpush1.bf16.xpose.msra.mxu0 0
        %1515 = vmatprep.subr.bf16.mxu0 0
        %1516 = vmatpush1.bf16.xpose.msra.mxu0 0
        %1517 = vmatprep.subr.bf16.mxu0 0
        %1518 = vmatpush1.bf16.xpose.msra.mxu0 0
        %1519 = vmatprep.subr.bf16.mxu0 0
        %1520 = vmatpush1.bf16.xpose.msra.mxu0 0
        %1521 = vmatprep.mubr.bf16.mxu0 0
        %1522 = vmatmul.mubr.bf16.gmra.mrb[0].mxu0 %v1484
        %v1523 = vpop.f32.mrb[0].mxu0
        %v1524 = vadd.f32 0.0, %v1523
        %v1525 = vpop.f32.mrb[0].mxu0
        %v1526 = vpop.f32.mrb[0].mxu0
        %v1527 = vpop.f32.mrb[0].mxu0
        %1528 = vdwg.mxu0
        %1529 = vrot.lane.b32.xlu0 %v794, 104
        %v1530 = vpop.permute.xlu0 %1529
        %1531 = vrot.lane.b32.xlu0 %v794, 72
        %v1532 = vpop.permute.xlu0 %1531
        %v1534 = vsel %vm798, %v1530, 0
        %v1537 = vsel %vm798, %v1532, 0
        %1539 = vmatprep.subr.bf16.mxu0 0
        %1540 = vmatpush1.bf16.xpose.msra.mxu0 %v1537
        %1541 = vmatprep.subr.bf16.mxu0 0
        %1542 = vmatpush1.bf16.xpose.msra.mxu0 0
        %1543 = vmatprep.subr.bf16.mxu0 0
        %1544 = vmatpush1.bf16.xpose.msra.mxu0 0
        %1545 = vmatprep.subr.bf16.mxu0 0
        %1546 = vmatpush1.bf16.xpose.msra.mxu0 0
        %1547 = vmatprep.subr.bf16.mxu0 0
        %1548 = vmatpush1.bf16.xpose.msra.mxu0 0
        %1549 = vmatprep.subr.bf16.mxu0 0
        %1550 = vmatpush1.bf16.xpose.msra.mxu0 0
        %1551 = vmatprep.subr.bf16.mxu0 0
        %1552 = vmatpush1.bf16.xpose.msra.mxu0 0
        %1553 = vmatprep.subr.bf16.mxu0 0
        %1554 = vmatpush1.bf16.xpose.msra.mxu0 0
        %1555 = vmatprep.subr.bf16.mxu0 0
        %1556 = vmatpush1.bf16.xpose.msra.mxu0 0
        %1557 = vmatprep.subr.bf16.mxu0 0
        %1558 = vmatpush1.bf16.xpose.msra.mxu0 0
        %1559 = vmatprep.subr.bf16.mxu0 0
        %1560 = vmatpush1.bf16.xpose.msra.mxu0 0
        %1561 = vmatprep.subr.bf16.mxu0 0
        %1562 = vmatpush1.bf16.xpose.msra.mxu0 0
        %1563 = vmatprep.subr.bf16.mxu0 0
        %1564 = vmatpush1.bf16.xpose.msra.mxu0 0
        %1565 = vmatprep.subr.bf16.mxu0 0
        %1566 = vmatpush1.bf16.xpose.msra.mxu0 0
        %1567 = vmatprep.subr.bf16.mxu0 0
        %1568 = vmatpush1.bf16.xpose.msra.mxu0 0
        %1569 = vmatprep.subr.bf16.mxu0 0
        %1570 = vmatpush1.bf16.xpose.msra.mxu0 0
        %1571 = vmatprep.mubr.bf16.mxu0 0
        %1572 = vmatmul.mubr.bf16.gmra.mrb[0].mxu0 %v1534
        %v1573 = vpop.f32.mrb[0].mxu0
        %v1574 = vadd.f32 0.0, %v1573
        %v1575 = vpop.f32.mrb[0].mxu0
        %v1576 = vpop.f32.mrb[0].mxu0
        %v1577 = vpop.f32.mrb[0].mxu0
        %1578 = vdwg.mxu0
        %v1579 = vsel %vm798, %v1524, -inf
        %1580 = vmax.xlane.f32.xlu0 %v1579
        %v1581 = vpop.xlane.xlu0 %1580
        %v1582 = vsel %vm798, %v1574, -inf
        %1583 = vmax.xlane.f32.xlu0 %v1582
        %v1584 = vpop.xlane.xlu0 %1583
        %v1585 = vsub.f32 %v1524, %v1581
        %v1586 = vsub.f32 %v1574, %v1584
        %v1587 = vmul.f32 %v1585, 1.442695
        %v1588 = vpow.pop %v1587
        %v1589 = vmul.f32 %v1586, 1.442695
        %v1590 = vpow.pop %v1589
        %v1591 = vsel %vm798, %v1588, 0.0
        %1592 = vadd.xlane.f32.xlu0 %v1591
        %v1593 = vpop.xlane.xlu0 %1592
        %v1594 = vsel %vm798, %v1590, 0.0
        %1595 = vadd.xlane.f32.xlu0 %v1594
        %v1596 = vpop.xlane.xlu0 %1595
        %v1597 = vrcp.pop %v1593
        %v1598 = vrcp.pop %v1596
        %v1599 = vmul.f32 %v1588, %v1597
        %v1600 = vmul.f32 %v1590, %v1598
        %v1601 = vpack.c.bf16 %v1599, %v1599
        %v1602 = vpack.c.bf16 %v1600, %v1600
        %1603 = vrot.lane.b32.xlu0 %v793, 40
        %v1604 = vpop.permute.xlu0 %1603
        %v1606 = vsel %vm798, %v1601, 0
        %v1609 = vsel %vm923, %v1604, 0
        %1611 = vmatprep.subr.bf16.mxu0 0
        %1612 = vmatpush1.bf16.msra.mxu0 %v1609
        %1613 = vmatprep.subr.bf16.mxu0 0
        %1614 = vmatpush1.bf16.msra.mxu0 0
        %1615 = vmatprep.subr.bf16.mxu0 0
        %1616 = vmatpush1.bf16.msra.mxu0 0
        %1617 = vmatprep.subr.bf16.mxu0 0
        %1618 = vmatpush1.bf16.msra.mxu0 0
        %1619 = vmatprep.subr.bf16.mxu0 0
        %1620 = vmatpush1.bf16.msra.mxu0 0
        %1621 = vmatprep.subr.bf16.mxu0 0
        %1622 = vmatpush1.bf16.msra.mxu0 0
        %1623 = vmatprep.subr.bf16.mxu0 0
        %1624 = vmatpush1.bf16.msra.mxu0 0
        %1625 = vmatprep.subr.bf16.mxu0 0
        %1626 = vmatpush1.bf16.msra.mxu0 0
        %1627 = vmatprep.subr.bf16.mxu0 0
        %1628 = vmatpush1.bf16.msra.mxu0 0
        %1629 = vmatprep.subr.bf16.mxu0 0
        %1630 = vmatpush1.bf16.msra.mxu0 0
        %1631 = vmatprep.subr.bf16.mxu0 0
        %1632 = vmatpush1.bf16.msra.mxu0 0
        %1633 = vmatprep.subr.bf16.mxu0 0
        %1634 = vmatpush1.bf16.msra.mxu0 0
        %1635 = vmatprep.subr.bf16.mxu0 0
        %1636 = vmatpush1.bf16.msra.mxu0 0
        %1637 = vmatprep.subr.bf16.mxu0 0
        %1638 = vmatpush1.bf16.msra.mxu0 0
        %1639 = vmatprep.subr.bf16.mxu0 0
        %1640 = vmatpush1.bf16.msra.mxu0 0
        %1641 = vmatprep.subr.bf16.mxu0 0
        %1642 = vmatpush1.bf16.msra.mxu0 0
        %1643 = vmatprep.mubr.bf16.mxu0 0
        %1644 = vmatmul.mubr.bf16.gmra.mrb[0].mxu0 %v1606
        %v1645 = vpop.f32.mrb[0].mxu0
        %v1646 = vadd.f32 0.0, %v1645
        %v1647 = vpop.f32.mrb[0].mxu0
        %v1648 = vpop.f32.mrb[0].mxu0
        %v1649 = vpop.f32.mrb[0].mxu0
        %1650 = vdwg.mxu0
        %1651 = vrot.lane.b32.xlu0 %v794, 40
        %v1652 = vpop.permute.xlu0 %1651
        %v1654 = vsel %vm798, %v1602, 0
        %v1657 = vsel %vm923, %v1652, 0
        %1659 = vmatprep.subr.bf16.mxu0 0
        %1660 = vmatpush1.bf16.msra.mxu0 %v1657
        %1661 = vmatprep.subr.bf16.mxu0 0
        %1662 = vmatpush1.bf16.msra.mxu0 0
        %1663 = vmatprep.subr.bf16.mxu0 0
        %1664 = vmatpush1.bf16.msra.mxu0 0
        %1665 = vmatprep.subr.bf16.mxu0 0
        %1666 = vmatpush1.bf16.msra.mxu0 0
        %1667 = vmatprep.subr.bf16.mxu0 0
        %1668 = vmatpush1.bf16.msra.mxu0 0
        %1669 = vmatprep.subr.bf16.mxu0 0
        %1670 = vmatpush1.bf16.msra.mxu0 0
        %1671 = vmatprep.subr.bf16.mxu0 0
        %1672 = vmatpush1.bf16.msra.mxu0 0
        %1673 = vmatprep.subr.bf16.mxu0 0
        %1674 = vmatpush1.bf16.msra.mxu0 0
        %1675 = vmatprep.subr.bf16.mxu0 0
        %1676 = vmatpush1.bf16.msra.mxu0 0
        %1677 = vmatprep.subr.bf16.mxu0 0
        %1678 = vmatpush1.bf16.msra.mxu0 0
        %1679 = vmatprep.subr.bf16.mxu0 0
        %1680 = vmatpush1.bf16.msra.mxu0 0
        %1681 = vmatprep.subr.bf16.mxu0 0
        %1682 = vmatpush1.bf16.msra.mxu0 0
        %1683 = vmatprep.subr.bf16.mxu0 0
        %1684 = vmatpush1.bf16.msra.mxu0 0
        %1685 = vmatprep.subr.bf16.mxu0 0
        %1686 = vmatpush1.bf16.msra.mxu0 0
        %1687 = vmatprep.subr.bf16.mxu0 0
        %1688 = vmatpush1.bf16.msra.mxu0 0
        %1689 = vmatprep.subr.bf16.mxu0 0
        %1690 = vmatpush1.bf16.msra.mxu0 0
        %1691 = vmatprep.mubr.bf16.mxu0 0
        %1692 = vmatmul.mubr.bf16.gmra.mrb[0].mxu0 %v1654
        %v1693 = vpop.f32.mrb[0].mxu0
        %v1694 = vadd.f32 0.0, %v1693
        %v1695 = vpop.f32.mrb[0].mxu0
        %v1696 = vpop.f32.mrb[0].mxu0
        %v1697 = vpop.f32.mrb[0].mxu0
        %1698 = vdwg.mxu0
        %1701 = vrot.lane.b32.xlu0 %v1646, 24
        %v1702 = vpop.permute.xlu0 %1701
        %1703 = vrot.lane.b32.xlu0 %v1694, 24
        %v1704 = vpop.permute.xlu0 %1703
        %vm1707 = vcmask 261312
        %1708 = vst.msk [vmem:[#allocation3] sm:$0xff] %vm1707, %v1702
        %1709 = vst.msk [vmem:[#allocation3 + $0x8] sm:$0xff] %vm1707, %v1704
        %v1710 = vld [vmem:[#allocation3] sm:$0xff]
        %v1711 = vld [vmem:[#allocation3 + $0x8] sm:$0xff]
        %v1712 = vpack.c.bf16 %v1711, %v1710
        %v1713 = vld [vmem:[%s659] sm:$0xf]
        %v1714 = vld [vmem:[%s659 + $0x4] sm:$0xf]
        %v1715 = vld [vmem:[%s659 + $0x8] sm:$0xf]
        %v1716 = vld [vmem:[%s659 + $0xc] sm:$0xf]
        %v1717 = vld [vmem:[%s543] sm:$0x1]
        %v1719 = vlaneseq
        %v1720 = vshrl.u32 %v1719, 7
        %v1721 = vsub.s32 0, %v1720
        %v1722 = vrot.slane %v1717, %v1721
        %v1728 = vunpack.c.l.b16 %v1713
        %v1729 = vunpack.c.l.b16 %v1714
        %v1730 = vunpack.c.l.b16 %v1715
        %v1731 = vunpack.c.l.b16 %v1716
        %v1732 = vpack.c.b16 %v1729, %v1728
        %v1733 = vpack.c.b16 %v1731, %v1730
        %v1737 = vsel %vm688, %v1712, 0
        %1739 = vmatprep.subr.bf16.mxu0 0
        %1740 = vmatpush1.bf16.msra.mxu0 %v1732
        %1741 = vmatprep.subr.bf16.mxu0 0
        %1742 = vmatpush1.bf16.msra.mxu0 %v1733
        %1743 = vmatprep.subr.bf16.mxu0 0
        %1744 = vmatpush1.bf16.msra.mxu0 0
        %1745 = vmatprep.subr.bf16.mxu0 0
        %1746 = vmatpush1.bf16.msra.mxu0 0
        %1747 = vmatprep.subr.bf16.mxu0 0
        %1748 = vmatpush1.bf16.msra.mxu0 0
        %1749 = vmatprep.subr.bf16.mxu0 0
        %1750 = vmatpush1.bf16.msra.mxu0 0
        %1751 = vmatprep.subr.bf16.mxu0 0
        %1752 = vmatpush1.bf16.msra.mxu0 0
        %1753 = vmatprep.subr.bf16.mxu0 0
        %1754 = vmatpush1.bf16.msra.mxu0 0
        %1755 = vmatprep.subr.bf16.mxu0 0
        %1756 = vmatpush1.bf16.msra.mxu0 0
        %1757 = vmatprep.subr.bf16.mxu0 0
        %1758 = vmatpush1.bf16.msra.mxu0 0
        %1759 = vmatprep.subr.bf16.mxu0 0
        %1760 = vmatpush1.bf16.msra.mxu0 0
        %1761 = vmatprep.subr.bf16.mxu0 0
        %1762 = vmatpush1.bf16.msra.mxu0 0
        %1763 = vmatprep.subr.bf16.mxu0 0
        %1764 = vmatpush1.bf16.msra.mxu0 0
        %1765 = vmatprep.subr.bf16.mxu0 0
        %1766 = vmatpush1.bf16.msra.mxu0 0
        %1767 = vmatprep.subr.bf16.mxu0 0
        %1768 = vmatpush1.bf16.msra.mxu0 0
        %1769 = vmatprep.subr.bf16.mxu0 0
        %1770 = vmatpush1.bf16.msra.mxu0 0
        %1771 = vmatprep.mubr.bf16.mxu0 0
        %1772 = vmatmul.mubr.bf16.gmra.mrb[0].mxu0 %v1737
        %v1773 = vpop.f32.mrb[0].mxu0
        %v1774 = vadd.f32 %v1722, %v1773
        %v1775 = vpop.f32.mrb[0].mxu0
        %v1776 = vpop.f32.mrb[0].mxu0
        %v1777 = vadd.f32 %v1722, %v1776
        %v1778 = vpop.f32.mrb[0].mxu0
        %1779 = vdwg.mxu0
        %v1780 = vadd.f32 %v684, %v1774
        %v1781 = vadd.f32 %v685, %v1777
        %v1782 = vld [vmem:[%s551] sm:$0x1]
        %v1783 = vld [vmem:[%s559] sm:$0x1]
        %v1784 = vsel %vm688, %v1780, 0.0
        %1785 = vadd.xlane.f32.xlu0 %v1784
        %v1786 = vpop.xlane.xlu0 %1785
        %v1787 = vsel %vm688, %v1781, 0.0
        %1788 = vadd.xlane.f32.xlu0 %v1787
        %v1789 = vpop.xlane.xlu0 %1788
        %v1790 = vmul.f32 %v1786, %v695
        %v1791 = vmul.f32 %v1789, %v695
        %v1792 = vsub.f32 %v1780, %v1790
        %v1793 = vsub.f32 %v1781, %v1791
        %v1794 = vmul.f32 %v1792, %v1792
        %v1795 = vmul.f32 %v1793, %v1793
        %v1796 = vsel %vm688, %v1794, 0.0
        %1797 = vadd.xlane.f32.xlu0 %v1796
        %v1798 = vpop.xlane.xlu0 %1797
        %v1799 = vsel %vm688, %v1795, 0.0
        %1800 = vadd.xlane.f32.xlu0 %v1799
        %v1801 = vpop.xlane.xlu0 %1800
        %v1802 = vmul.f32 %v1798, %v695
        %v1803 = vmul.f32 %v1801, %v695
        %v1804 = vadd.f32 %v1802, 1e-05
        %v1805 = vadd.f32 %v1803, 1e-05
        %v1806 = vrsqrt.pop %v1804
        %v1807 = vrsqrt.pop %v1805
        %v1808 = vmul.f32 %v1792, %v1806
        %v1809 = vmul.f32 %v1793, %v1807
        %v1811 = vlaneseq
        %v1812 = vshrl.u32 %v1811, 7
        %v1813 = vsub.s32 0, %v1812
        %v1814 = vrot.slane %v1782, %v1813
        %v1816 = vmul.f32 %v1808, %v1814
        %v1817 = vmul.f32 %v1809, %v1814
        %v1819 = vlaneseq
        %v1820 = vshrl.u32 %v1819, 7
        %v1821 = vsub.s32 0, %v1820
        %v1822 = vrot.slane %v1783, %v1821
        %v1824 = vadd.f32 %v1816, %v1822
        %v1825 = vadd.f32 %v1817, %v1822
        %v1826 = vpack.c.bf16 %v1825, %v1824
        %v1827 = vld [vmem:[%s664] sm:$0xf]
        %v1828 = vld [vmem:[%s664 + $0x4] sm:$0xf]
        %v1829 = vld [vmem:[%s664 + $0x8] sm:$0xf]
        %v1830 = vld [vmem:[%s664 + $0xc] sm:$0xf]
        %v1831 = vld [vmem:[%s567] sm:$0x1]
        %v1833 = vlaneseq
        %v1834 = vshrl.u32 %v1833, 7
        %v1835 = vsub.s32 0, %v1834
        %v1836 = vrot.slane %v1831, %v1835
        %v1842 = vunpack.c.l.b16 %v1827
        %v1843 = vunpack.c.l.b16 %v1828
        %v1844 = vunpack.c.l.b16 %v1829
        %v1845 = vunpack.c.l.b16 %v1830
        %v1846 = vpack.c.b16 %v1843, %v1842
        %v1847 = vpack.c.b16 %v1845, %v1844
        %v1851 = vsel %vm688, %v1826, 0
        %1853 = vmatprep.subr.bf16.mxu0 0
        %1854 = vmatpush1.bf16.msra.mxu0 %v1846
        %1855 = vmatprep.subr.bf16.mxu0 0
        %1856 = vmatpush1.bf16.msra.mxu0 %v1847
        %1857 = vmatprep.subr.bf16.mxu0 0
        %1858 = vmatpush1.bf16.msra.mxu0 0
        %1859 = vmatprep.subr.bf16.mxu0 0
        %1860 = vmatpush1.bf16.msra.mxu0 0
        %1861 = vmatprep.subr.bf16.mxu0 0
        %1862 = vmatpush1.bf16.msra.mxu0 0
        %1863 = vmatprep.subr.bf16.mxu0 0
        %1864 = vmatpush1.bf16.msra.mxu0 0
        %1865 = vmatprep.subr.bf16.mxu0 0
        %1866 = vmatpush1.bf16.msra.mxu0 0
        %1867 = vmatprep.subr.bf16.mxu0 0
        %1868 = vmatpush1.bf16.msra.mxu0 0
        %1869 = vmatprep.subr.bf16.mxu0 0
        %1870 = vmatpush1.bf16.msra.mxu0 0
        %1871 = vmatprep.subr.bf16.mxu0 0
        %1872 = vmatpush1.bf16.msra.mxu0 0
        %1873 = vmatprep.subr.bf16.mxu0 0
        %1874 = vmatpush1.bf16.msra.mxu0 0
        %1875 = vmatprep.subr.bf16.mxu0 0
        %1876 = vmatpush1.bf16.msra.mxu0 0
        %1877 = vmatprep.subr.bf16.mxu0 0
        %1878 = vmatpush1.bf16.msra.mxu0 0
        %1879 = vmatprep.subr.bf16.mxu0 0
        %1880 = vmatpush1.bf16.msra.mxu0 0
        %1881 = vmatprep.subr.bf16.mxu0 0
        %1882 = vmatpush1.bf16.msra.mxu0 0
        %1883 = vmatprep.subr.bf16.mxu0 0
        %1884 = vmatpush1.bf16.msra.mxu0 0
        %1885 = vmatprep.mubr.bf16.mxu0 0
        %1886 = vmatmul.mubr.bf16.gmra.mrb[0].mxu0 %v1851
        %v1887 = vpop.f32.mrb[0].mxu0
        %v1888 = vadd.f32 %v1836, %v1887
        %v1889 = vpop.f32.mrb[0].mxu0
        %v1890 = vpop.f32.mrb[0].mxu0
        %v1891 = vadd.f32 %v1836, %v1890
        %v1892 = vpop.f32.mrb[0].mxu0
        %1893 = vdwg.mxu0
        %v1894 = vmax.f32 %v1888, 0.0
        %v1895 = vmax.f32 %v1891, 0.0
        %v1896 = vpack.c.bf16 %v1895, %v1894
        %v1897 = vld [vmem:[%s669] sm:$0xf]
        %v1898 = vld [vmem:[%s669 + $0x4] sm:$0xf]
        %v1899 = vld [vmem:[%s669 + $0x8] sm:$0xf]
        %v1900 = vld [vmem:[%s669 + $0xc] sm:$0xf]
        %v1901 = vld [vmem:[%s669 + $0x10] sm:$0xf]
        %v1902 = vld [vmem:[%s669 + $0x14] sm:$0xf]
        %v1903 = vld [vmem:[%s669 + $0x18] sm:$0xf]
        %v1904 = vld [vmem:[%s669 + $0x1c] sm:$0xf]
        %v1905 = vld [vmem:[%s672] sm:$0x1]
        %v1907 = vlaneseq
        %v1908 = vshrl.u32 %v1907, 7
        %v1909 = vsub.s32 0, %v1908
        %v1910 = vrot.slane %v1905, %v1909
        %v1920 = vunpack.c.l.b16 %v1897
        %v1921 = vunpack.c.l.b16 %v1898
        %v1922 = vunpack.c.l.b16 %v1899
        %v1923 = vunpack.c.l.b16 %v1900
        %v1924 = vunpack.c.l.b16 %v1901
        %v1925 = vunpack.c.l.b16 %v1902
        %v1926 = vunpack.c.l.b16 %v1903
        %v1927 = vunpack.c.l.b16 %v1904
        %v1928 = vpack.c.b16 %v1921, %v1920
        %v1929 = vpack.c.b16 %v1923, %v1922
        %v1930 = vpack.c.b16 %v1925, %v1924
        %v1931 = vpack.c.b16 %v1927, %v1926
        %vm1936 = vcmask 523264
        %v1938 = vsel %vm1936, %v1896, 0
        %1940 = vmatprep.subr.bf16.mxu0 0
        %1941 = vmatpush1.bf16.msra.mxu0 %v1928
        %1942 = vmatprep.subr.bf16.mxu0 0
        %1943 = vmatpush1.bf16.msra.mxu0 %v1929
        %1944 = vmatprep.subr.bf16.mxu0 0
        %1945 = vmatpush1.bf16.msra.mxu0 %v1930
        %1946 = vmatprep.subr.bf16.mxu0 0
        %1947 = vmatpush1.bf16.msra.mxu0 %v1931
        %1948 = vmatprep.subr.bf16.mxu0 0
        %1949 = vmatpush1.bf16.msra.mxu0 0
        %1950 = vmatprep.subr.bf16.mxu0 0
        %1951 = vmatpush1.bf16.msra.mxu0 0
        %1952 = vmatprep.subr.bf16.mxu0 0
        %1953 = vmatpush1.bf16.msra.mxu0 0
        %1954 = vmatprep.subr.bf16.mxu0 0
        %1955 = vmatpush1.bf16.msra.mxu0 0
        %1956 = vmatprep.subr.bf16.mxu0 0
        %1957 = vmatpush1.bf16.msra.mxu0 0
        %1958 = vmatprep.subr.bf16.mxu0 0
        %1959 = vmatpush1.bf16.msra.mxu0 0
        %1960 = vmatprep.subr.bf16.mxu0 0
        %1961 = vmatpush1.bf16.msra.mxu0 0
        %1962 = vmatprep.subr.bf16.mxu0 0
        %1963 = vmatpush1.bf16.msra.mxu0 0
        %1964 = vmatprep.subr.bf16.mxu0 0
        %1965 = vmatpush1.bf16.msra.mxu0 0
        %1966 = vmatprep.subr.bf16.mxu0 0
        %1967 = vmatpush1.bf16.msra.mxu0 0
        %1968 = vmatprep.subr.bf16.mxu0 0
        %1969 = vmatpush1.bf16.msra.mxu0 0
        %1970 = vmatprep.subr.bf16.mxu0 0
        %1971 = vmatpush1.bf16.msra.mxu0 0
        %1972 = vmatprep.mubr.bf16.mxu0 0
        %1973 = vmatmul.mubr.bf16.gmra.mrb[0].mxu0 %v1938
        %v1974 = vpop.f32.mrb[0].mxu0
        %v1975 = vadd.f32 %v1910, %v1974
        %v1976 = vpop.f32.mrb[0].mxu0
        %v1977 = vpop.f32.mrb[0].mxu0
        %v1978 = vadd.f32 %v1910, %v1977
        %v1979 = vpop.f32.mrb[0].mxu0
        %1980 = vdwg.mxu0
        %v1981 = vadd.f32 %v1780, %v1975
        %v1982 = vadd.f32 %v1781, %v1978
        %1983 = vst.msk [vmem:[#allocation2] sm:$0xff] %vm688, %v1981
        %1984 = vst.msk [vmem:[#allocation2 + $0x8] sm:$0xff] %vm688, %v1982
        %p1985 = scmp.eq.s32.totalorder %s36, 1
        // Predicated region
        $region93: #{tpu_custom_call.1} parent=67 // pred_check
          %p1986 = pneg %p1985
        $region94: #{tpu_custom_call.1} parent=67 // pred_check_branch
          %1988 = sbr.rel (%p1986) target = $region96
        $region95: #{tpu_custom_call.1} parent=67 // pred_region
          %v1989 = vld [vmem:[#allocation2] sm:$0xff]
          %v1990 = vld [vmem:[#allocation2 + $0x8] sm:$0xff]
          %1991 = vst.msk [vmem:[#allocation13] sm:$0xff] %vm688, %v1989
          %1992 = vst.msk [vmem:[#allocation13 + $0x8] sm:$0xff] %vm688, %v1990
        $region96: #{tpu_custom_call.1} parent=67 // pred_fallthru
          _
        // Predicated region
        $region97: #{tpu_custom_call.1} parent=67 // pred_check
          %p1993 = pneg %p373
        $region98: #{tpu_custom_call.1} parent=67 // pred_check_branch
          %1995 = sbr.rel (%p1993) target = $region100
        $region99: #{tpu_custom_call.1} parent=67 // pred_region
          %s1996 = smul.u32 2, %s35
          %s1998 = ssub.s32 256, 256
          %1999 = vsyncadd [#allocation6], %s1998
          %s2000 = smul.addr %s1996, 128
          %s2001 = scalar_lea.hbm %s12, %s2000
          %s2002 = sshll.u32 [#allocation13], 4
          %s2003 = int_to_ptr.vmem [resolvable:$true] %s2002
          %2008 = dma.vmem_to_hbm [thread:$0]  %s2003, 256, %s2001, [#allocation6], 128, 128, 8
        $region100: #{tpu_custom_call.1} parent=67 // pred_fallthru
          _
        // Predicated region
        $region101: #{tpu_custom_call.1} parent=67 // pred_check
          %p2009 = pneg %p373
        $region102: #{tpu_custom_call.1} parent=67 // pred_check_branch
          %2011 = sbr.rel (%p2009) target = $region104
        $region103: #{tpu_custom_call.1} parent=67 // pred_region
          %2012 = dma.done [#allocation6], 256
        $region104: #{tpu_custom_call.1} parent=67 // pred_fallthru
          _
      $region68: #{tpu_custom_call.1} parent=5 // pred_fallthru
        _
      %p2013 = scmp.le.s32.totalorder 2, %s26
      // Predicated region
      $region105: #{tpu_custom_call.1} parent=5 // pred_check
        %p2014 = pneg %p2013
      $region106: #{tpu_custom_call.1} parent=5 // pred_check_branch
        %2016 = sbr.rel (%p2014) target = $region108
      $region107: #{tpu_custom_call.1} parent=5 // pred_region
        %s2017 = ssub.s32 %s26, 2
      $region108: #{tpu_custom_call.1} parent=5 // pred_fallthru
        _
    $region6: #{tpu_custom_call.1} parent=1 // loop_footer
      %s30 = sadd.s32 1, %s26
    $region7: #{tpu_custom_call.1} parent=1 // loop_footer_branch
      %25 = sbr.rel target = $region3
    $region8: #{tpu_custom_call.1} parent=1 // loop_exit
      _
    %2018 = vsyncpa [#allocation5], 1
    %s2019 = scalar_lea.sflag [#allocation5], 1
    %2020 = vsyncpa %s2019, 1
    %2021 = vsyncpa [#allocation8], 1
    %s2022 = scalar_lea.sflag [#allocation8], 1
    %2023 = vsyncpa %s2022, 1
    %2024 = vsyncpa [#allocation11], 1
    %s2025 = scalar_lea.sflag [#allocation11], 1
    %2026 = vsyncpa %s2025, 1
    %2027 = vsyncpa [#allocation6], 1
    %s2028 = scalar_lea.sflag [#allocation6], 1
    %2029 = vsyncpa %s2028, 1

</llo_original>
